<compile_context>
chip_gen: v6e
topology: v6e:2x2x1
jax: 0.10.0
libtpu: 0.0.40
codegen_flags: <defaults>
</compile_context>

<pallas_src>
import functools

import jax
import jax.numpy as jnp
import numpy as np
from jax.experimental import pallas as pl
from jax.experimental.pallas import tpu as pltpu


# ----------------------------------------------------------------------------
# Kernel
# ----------------------------------------------------------------------------
def _silu(y):
    return y * (1.0 / (1.0 + jnp.exp(-y)))


def _elan_kernel(H, TR,
                 xc_ref, xu_ref, xd_ref,
                 wpw1_ref, bpw1_ref, wpw4_ref, bpw4_ref,
                 w3_ref, b3_ref, w4_ref, b4_ref,
                 wf3_ref, wf2_ref, wf1_ref, wf4_ref, bf_ref,
                 o_ref, xw_ref):
    """One (batch, row-tile) step of the fused ELAN block.

    Activations use a width-major lane layout: last dim = W*C (or (W+2)*C for
    tensors that carry the horizontal zero padding in-band).
    """
    f32 = jnp.float32
    r = pl.program_id(1)

    # ---- assemble the x row window [r*TR-2, r*TR+TR+2) into VMEM scratch ----
    xc = xc_ref[0]                                       # (TR, W*Cin)
    xw_ref[0:2, :] = xu_ref[0, TR - 2:TR, :]             # rows above the tile
    xw_ref[2:TR + 2, :] = xc
    xw_ref[TR + 2:TR + 4, :] = xd_ref[0, 0:2, :]         # rows below the tile
    xw = xw_ref[...]                                     # (TR+4, W*Cin)

    # ---- conv2 (1x1 + BN + SiLU) -> y1, padded-width lane layout -----------
    y1p = _silu(jnp.dot(xw, wpw1_ref[...], preferred_element_type=f32)
                + bpw1_ref[...])                         # (TR+4, (W+2)*h)
    # zero the rows that fall outside the image (vertical zero padding for conv3)
    row1 = jax.lax.broadcasted_iota(jnp.int32, (TR + 4, 1), 0) + r * TR - 2
    y1p = y1p * ((row1 >= 0) & (row1 < H)).astype(f32)

    # ---- conv3 (3x3): 3 banded matmuls, one per kernel row dy --------------
    acc2 = jnp.zeros((TR + 2, w3_ref.shape[-1]), f32)
    for dy in range(3):
        acc2 = acc2 + jnp.dot(y1p[dy:dy + TR + 2, :], w3_ref[dy],
                              preferred_element_type=f32)
    y2p = _silu(acc2 + b3_ref[...])                      # (TR+2, (W+2)*h)
    row2 = jax.lax.broadcasted_iota(jnp.int32, (TR + 2, 1), 0) + r * TR - 1
    y2p = y2p * ((row2 >= 0) & (row2 < H)).astype(f32)   # vertical pad for conv4

    # ---- conv4 (3x3) -------------------------------------------------------
    acc3 = jnp.zeros((TR, w4_ref.shape[-1]), f32)
    for dy in range(3):
        acc3 = acc3 + jnp.dot(y2p[dy:dy + TR, :], w4_ref[dy],
                              preferred_element_type=f32)
    y3 = _silu(acc3 + b4_ref[...])                       # (TR, W*h)

    # ---- conv1 (1x1) on the interior rows ----------------------------------
    y4 = _silu(jnp.dot(xc, wpw4_ref[...], preferred_element_type=f32)
               + bpw4_ref[...])                          # (TR, W*h)

    # ---- con_fuse: 1x1 over concat([y3,y2,y1,y4]) done as 4 matmuls --------
    out = (jnp.dot(y3, wf3_ref[...], preferred_element_type=f32)
           + jnp.dot(y2p[1:TR + 1, :], wf2_ref[...], preferred_element_type=f32)
           + jnp.dot(y1p[2:TR + 2, :], wf1_ref[...], preferred_element_type=f32)
           + jnp.dot(y4, wf4_ref[...], preferred_element_type=f32)
           + bf_ref[...])                                # (TR, W*Cout)
    o_ref[0] = _silu(out).astype(o_ref.dtype)            # lane-dense store


# ----------------------------------------------------------------------------
# Weight packing (host-side, done once): convs -> banded matmul matrices over
# the width-major lane layout.
# ----------------------------------------------------------------------------
def _pack_pointwise(w2d, b, W, pad_out):
    """1x1 conv (Cin, Cout) -> block-diagonal (W*Cin, W(+2)*Cout) matrix."""
    co = w2d.shape[1]
    Wm = jnp.kron(jnp.eye(W, dtype=w2d.dtype), w2d)
    bm = jnp.tile(b, W)
    if pad_out:                      # emit zero columns for the width halo
        Wm = jnp.pad(Wm, ((0, 0), (co, co)))
        bm = jnp.pad(bm, (co, co))
    return Wm, bm.reshape(1, -1)


def _pack_conv3(w, b, W, pad_out):
    """3x3 conv (HWIO) -> 3 banded matrices ((W+2)*Cin, W(+2)*Cout), one per dy."""
    co = w.shape[3]
    win = jnp.arange(W + 2)
    mats = []
    for dy in range(3):
        acc = None
        for dx in range(3):
            if pad_out:
                wout = jnp.arange(W + 2)
                valid = (wout >= 1) & (wout <= W)
                P = (win[:, None] == (wout[None, :] - 1 + dx)) & valid[None, :]
            else:
                wout = jnp.arange(W)
                P = win[:, None] == (wout[None, :] + dx)
            m = jnp.kron(P.astype(w.dtype), w[dy, dx])
            acc = m if acc is None else acc + m
        mats.append(acc)
    Ws = jnp.stack(mats, axis=0)
    bm = jnp.tile(b, W)
    if pad_out:
        bm = jnp.pad(bm, (co, co))
    return Ws, bm.reshape(1, -1)


def _pack_fuse(wf2d, bf, W, hidden):
    """Fuse conv (4h, Cout) split into 4 per-branch matrices -> (.., W*Cout)."""
    eyeW = jnp.eye(W, dtype=wf2d.dtype)
    win = jnp.arange(W + 2)
    wo = jnp.arange(W)
    Pf = (win[:, None] == (wo[None, :] + 1)).astype(wf2d.dtype)  # padded -> interior
    Wf3 = jnp.kron(eyeW, wf2d[0:hidden])
    Wf2 = jnp.kron(Pf, wf2d[hidden:2 * hidden])
    Wf1 = jnp.kron(Pf, wf2d[2 * hidden:3 * hidden])
    Wf4 = jnp.kron(eyeW, wf2d[3 * hidden:4 * hidden])
    bfp = jnp.tile(bf, W).reshape(1, -1)
    return Wf3, Wf2, Wf1, Wf4, bfp


def pack_elan_params(params, W):
    w1, b1 = params["conv1"]      # 1x1 in -> hidden   (y4 branch)
    w2, b2 = params["conv2"]      # 1x1 in -> hidden   (y1 branch)
    w3, b3 = params["conv3"]      # 3x3 hidden -> hidden
    w4, b4 = params["conv4"]      # 3x3 hidden -> hidden
    wf, bf = params["con_fuse"]   # 1x1 4*hidden -> out
    hidden = w1.shape[-1]

    Wpw1, bpw1 = _pack_pointwise(w2[0, 0], b2, W, pad_out=True)
    Wpw4, bpw4 = _pack_pointwise(w1[0, 0], b1, W, pad_out=False)
    W3s, b3p = _pack_conv3(w3, b3, W, pad_out=True)
    W4s, b4p = _pack_conv3(w4, b4, W, pad_out=False)
    Wf3, Wf2, Wf1, Wf4, bfp = _pack_fuse(wf[0, 0], bf, W, hidden)
    return (Wpw1, bpw1, Wpw4, bpw4, W3s, b3p, W4s, b4p, Wf3, Wf2, Wf1, Wf4, bfp)


# ----------------------------------------------------------------------------
# Fused forward
# ----------------------------------------------------------------------------
def _const_index(nd):
    return lambda n, r: (0,) * nd


@jax.jit
def elan_forward(x_nchw, packed):
    N, Cin, H, W = x_nchw.shape
    Wf3 = packed[8]
    Cout = Wf3.shape[1] // W

    # Row-tile selection: multiple of 8 when possible, else the full height.
    if H % 8 == 0 and H >= 16:
        TR = max(t for t in range(8, min(H // 2, 64) + 1, 8) if H % t == 0)
    else:
        TR = H
    RT = H // TR

    WC, WO = W * Cin, W * Cout
    X2 = jnp.transpose(x_nchw, (0, 2, 3, 1)).reshape(N, H, WC)  # width-major lanes

    x_core = pl.BlockSpec((1, TR, WC), lambda n, r: (n, r, 0))
    x_up = pl.BlockSpec((1, TR, WC), lambda n, r: (n, jnp.maximum(r - 1, 0), 0))
    x_dn = pl.BlockSpec((1, TR, WC),
                        lambda n, r: (n, jnp.minimum(r + 1, RT - 1), 0))
    w_specs = [pl.BlockSpec(a.shape, _const_index(a.ndim)) for a in packed]

    out2 = pl.pallas_call(
        functools.partial(_elan_kernel, H, TR),
        out_shape=jax.ShapeDtypeStruct((N, H, WO), jnp.float32),
        grid=(N, RT),
        in_specs=[x_core, x_up, x_dn] + w_specs,
        out_specs=pl.BlockSpec((1, TR, WO), lambda n, r: (n, r, 0)),
        scratch_shapes=[pltpu.VMEM((TR + 4, WC), jnp.float32)],
        compiler_params=pltpu.CompilerParams(
            dimension_semantics=("parallel", "parallel"),
            vmem_limit_bytes=32 * 1024 * 1024),
    )(X2, X2, X2, *packed)

    out = out2.reshape(N, H, W, Cout)
    return jnp.transpose(out, (0, 3, 1, 2))  # NHWC -> NCHW


# ----------------------------------------------------------------------------
# Parameter construction (deterministic, synthetic) with BN folding (eval mode)
# ----------------------------------------------------------------------------
def make_baseconv_params(key, cin, cout, ksize):
    k1, k2, k3, k4, k5 = jax.random.split(key, 5)
    w = 0.1 * jax.random.normal(k1, (ksize, ksize, cin, cout), jnp.float32)
    gamma = 1.0 + 0.1 * jax.random.normal(k2, (cout,), jnp.float32)
    beta = 0.1 * jax.random.normal(k3, (cout,), jnp.float32)
    rmean = 0.1 * jax.random.normal(k4, (cout,), jnp.float32)
    rvar = 1.0 + 0.1 * jax.random.uniform(k5, (cout,), jnp.float32)
    eps = 1e-3  # matches nn.BatchNorm2d(eps=0.001)
    scale = gamma / jnp.sqrt(rvar + eps)
    return w * scale, beta - rmean * scale


def make_elan_params(key, in_channel, out_channel):
    hidden = int(out_channel * 0.5)
    keys = jax.random.split(key, 5)
    return {
        "conv1":    make_baseconv_params(keys[0], in_channel, hidden, 1),
        "conv2":    make_baseconv_params(keys[1], in_channel, hidden, 1),
        "conv3":    make_baseconv_params(keys[2], hidden, hidden, 3),
        "conv4":    make_baseconv_params(keys[3], hidden, hidden, 3),
        "con_fuse": make_baseconv_params(keys[4], hidden * 4, out_channel, 1),
    }


# ----------------------------------------------------------------------------
# Pure-JAX reference (for correctness check)
# ----------------------------------------------------------------------------
def _ref_conv_bn_silu(x, w, b, pad):
    y = jax.lax.conv_general_dilated(
        x, w, window_strides=(1, 1), padding=[(pad, pad), (pad, pad)],
        dimension_numbers=("NHWC", "HWIO", "NHWC"))
    y = y + b
    return y * jax.nn.sigmoid(y)


def elan_forward_ref(x_nchw, params):
    x = jnp.transpose(x_nchw, (0, 2, 3, 1))
    y1 = _ref_conv_bn_silu(x, *params["conv2"], pad=0)
    y2 = _ref_conv_bn_silu(y1, *params["conv3"], pad=1)
    y3 = _ref_conv_bn_silu(y2, *params["conv4"], pad=1)
    y4 = _ref_conv_bn_silu(x, *params["conv1"], pad=0)
    cat = jnp.concatenate([y3, y2, y1, y4], axis=-1)
    out = _ref_conv_bn_silu(cat, *params["con_fuse"], pad=0)
    return jnp.transpose(out, (0, 3, 1, 2))


# ----------------------------------------------------------------------------
if __name__ == "__main__":
    key = jax.random.PRNGKey(0)
    kx, kp = jax.random.split(key)

    N, C_in, H, W = 2, 4, 16, 16
    C_out = 8  # hidden = 4

    x = jax.random.normal(kx, (N, C_in, H, W), jnp.float32)
    params = make_elan_params(kp, C_in, C_out)
    packed = pack_elan_params(params, W)

    out = jax.block_until_ready(elan_forward(x, packed))
    ref = jax.block_until_ready(elan_forward_ref(x, params))

    assert out.shape == (N, C_out, H, W), out.shape
    np.testing.assert_allclose(np.asarray(out), np.asarray(ref),
                               rtol=1e-4, atol=1e-4)
    print("KERNEL_OK")
</pallas_src>

<mosaic_0001>
module attributes {stable_mosaic.version = 11 : i64} {
  func.func @_elan_kernel(%arg0: i32, %arg1: i32, %arg2: memref<1x8x64xf32, #tpu.memory_space<vmem>>, %arg3: memref<1x8x64xf32, #tpu.memory_space<vmem>>, %arg4: memref<1x8x64xf32, #tpu.memory_space<vmem>>, %arg5: memref<64x72xf32, #tpu.memory_space<vmem>>, %arg6: memref<1x72xf32, #tpu.memory_space<vmem>>, %arg7: memref<64x64xf32, #tpu.memory_space<vmem>>, %arg8: memref<1x64xf32, #tpu.memory_space<vmem>>, %arg9: memref<3x72x72xf32, #tpu.memory_space<vmem>>, %arg10: memref<1x72xf32, #tpu.memory_space<vmem>>, %arg11: memref<3x72x64xf32, #tpu.memory_space<vmem>>, %arg12: memref<1x64xf32, #tpu.memory_space<vmem>>, %arg13: memref<64x128xf32, #tpu.memory_space<vmem>>, %arg14: memref<72x128xf32, #tpu.memory_space<vmem>>, %arg15: memref<72x128xf32, #tpu.memory_space<vmem>>, %arg16: memref<64x128xf32, #tpu.memory_space<vmem>>, %arg17: memref<1x128xf32, #tpu.memory_space<vmem>>, %arg18: memref<1x8x128xf32, #tpu.memory_space<vmem>>, %arg19: memref<12x64xf32, #tpu.memory_space<vmem>>) attributes {dimension_semantics = [#tpu.dimension_semantics<parallel>, #tpu.dimension_semantics<parallel>], iteration_bounds = array<i64: 2, 2>, scalar_prefetch = 0 : i64, scratch_operands = 1 : i64, tpu.core_type = #tpu.core_type<tc>, window_params = [{transform_indices = @transform_0, window_bounds = array<i64: 1, 8, 64>}, {transform_indices = @transform_1, window_bounds = array<i64: 1, 8, 64>}, {transform_indices = @transform_2, window_bounds = array<i64: 1, 8, 64>}, {pipeline_mode = #tpu.pipeline_mode<synchronous>, transform_indices = @transform_3, window_bounds = array<i64: 64, 72>}, {pipeline_mode = #tpu.pipeline_mode<synchronous>, transform_indices = @transform_4, window_bounds = array<i64: 1, 72>}, {pipeline_mode = #tpu.pipeline_mode<synchronous>, transform_indices = @transform_5, window_bounds = array<i64: 64, 64>}, {pipeline_mode = #tpu.pipeline_mode<synchronous>, transform_indices = @transform_6, window_bounds = array<i64: 1, 64>}, {pipeline_mode = #tpu.pipeline_mode<synchronous>, transform_indices = @transform_7, window_bounds = array<i64: 3, 72, 72>}, {pipeline_mode = #tpu.pipeline_mode<synchronous>, transform_indices = @transform_8, window_bounds = array<i64: 1, 72>}, {pipeline_mode = #tpu.pipeline_mode<synchronous>, transform_indices = @transform_9, window_bounds = array<i64: 3, 72, 64>}, {pipeline_mode = #tpu.pipeline_mode<synchronous>, transform_indices = @transform_10, window_bounds = array<i64: 1, 64>}, {pipeline_mode = #tpu.pipeline_mode<synchronous>, transform_indices = @transform_11, window_bounds = array<i64: 64, 128>}, {pipeline_mode = #tpu.pipeline_mode<synchronous>, transform_indices = @transform_12, window_bounds = array<i64: 72, 128>}, {pipeline_mode = #tpu.pipeline_mode<synchronous>, transform_indices = @transform_13, window_bounds = array<i64: 72, 128>}, {pipeline_mode = #tpu.pipeline_mode<synchronous>, transform_indices = @transform_14, window_bounds = array<i64: 64, 128>}, {pipeline_mode = #tpu.pipeline_mode<synchronous>, transform_indices = @transform_15, window_bounds = array<i64: 1, 128>}, {transform_indices = @transform_16, window_bounds = array<i64: 1, 8, 128>}]} {
    %c0 = arith.constant 0 : index
    %c0_0 = arith.constant 0 : index
    %c0_1 = arith.constant 0 : index
    %0 = vector.load %arg2[%c0, %c0_0, %c0_1] : memref<1x8x64xf32, #tpu.memory_space<vmem>>, vector<1x8x64xf32>
    %1 = vector.shape_cast %0 : vector<1x8x64xf32> to vector<8x64xf32>
    %c0_2 = arith.constant 0 : index
    %c6 = arith.constant 6 : index
    %c0_3 = arith.constant 0 : index
    %2 = vector.load %arg3[%c0_2, %c6, %c0_3] : memref<1x8x64xf32, #tpu.memory_space<vmem>>, vector<1x2x64xf32>
    %3 = vector.shape_cast %2 : vector<1x2x64xf32> to vector<2x64xf32>
    %c0_4 = arith.constant 0 : index
    %c0_5 = arith.constant 0 : index
    %4 = vector.load %arg19[%c0_4, %c0_5] : memref<12x64xf32, #tpu.memory_space<vmem>>, vector<2x64xf32>
    tpu.vector_store %arg19[%c0_4, %c0_5], %3 {strides = array<i32>} : memref<12x64xf32, #tpu.memory_space<vmem>>, vector<2x64xf32>,
    %c2 = arith.constant 2 : index
    %c0_6 = arith.constant 0 : index
    %5 = vector.load %arg19[%c2, %c0_6] : memref<12x64xf32, #tpu.memory_space<vmem>>, vector<8x64xf32>
    tpu.vector_store %arg19[%c2, %c0_6], %1 {strides = array<i32>} : memref<12x64xf32, #tpu.memory_space<vmem>>, vector<8x64xf32>,
    %c0_7 = arith.constant 0 : index
    %c0_8 = arith.constant 0 : index
    %c0_9 = arith.constant 0 : index
    %6 = vector.load %arg4[%c0_7, %c0_8, %c0_9] : memref<1x8x64xf32, #tpu.memory_space<vmem>>, vector<1x2x64xf32>
    %7 = vector.shape_cast %6 : vector<1x2x64xf32> to vector<2x64xf32>
    %c10 = arith.constant 10 : index
    %c0_10 = arith.constant 0 : index
    %8 = vector.load %arg19[%c10, %c0_10] : memref<12x64xf32, #tpu.memory_space<vmem>>, vector<2x64xf32>
    tpu.vector_store %arg19[%c10, %c0_10], %7 {strides = array<i32>} : memref<12x64xf32, #tpu.memory_space<vmem>>, vector<2x64xf32>,
    %c0_11 = arith.constant 0 : index
    %c0_12 = arith.constant 0 : index
    %9 = vector.load %arg19[%c0_11, %c0_12] : memref<12x64xf32, #tpu.memory_space<vmem>>, vector<12x64xf32>
    %c0_13 = arith.constant 0 : index
    %c0_14 = arith.constant 0 : index
    %10 = vector.load %arg5[%c0_13, %c0_14] : memref<64x72xf32, #tpu.memory_space<vmem>>, vector<64x72xf32>
    %cst = arith.constant dense<0.000000e+00> : vector<12x72xf32>
    %11 = tpu.matmul %9, %10, %cst {dimension_numbers = #tpu.dot_dimension_numbers<[1], [0], [0], [1], [0, 0, 1, 1], [], []>} : vector<12x64xf32>, vector<64x72xf32>, vector<12x72xf32> -> vector<12x72xf32>
    %c0_15 = arith.constant 0 : index
    %c0_16 = arith.constant 0 : index
    %12 = vector.load %arg6[%c0_15, %c0_16] : memref<1x72xf32, #tpu.memory_space<vmem>>, vector<1x72xf32>
    %13 = vector.broadcast %12 : vector<1x72xf32> to vector<12x72xf32>
    %14 = arith.addf %11, %13 : vector<12x72xf32>
    %cst_17 = arith.constant 0.000000e+00 : f32
    %15 = vector.broadcast %cst_17 : f32 to vector<12x72xf32>
    %16 = arith.subf %15, %14 : vector<12x72xf32>
    %17 = math.exp %16 : vector<12x72xf32>
    %cst_18 = arith.constant 1.000000e+00 : f32
    %18 = vector.broadcast %cst_18 : f32 to vector<12x72xf32>
    %19 = arith.addf %18, %17 : vector<12x72xf32>
    %cst_19 = arith.constant 1.000000e+00 : f32
    %20 = vector.broadcast %cst_19 : f32 to vector<12x72xf32>
    %21 = arith.divf %20, %19 : vector<12x72xf32>
    %22 = arith.mulf %14, %21 : vector<12x72xf32>
    %23 = tpu.iota {dimensions = array<i32: 0>} : vector<12x1xi32>
    %c8_i32 = arith.constant 8 : i32
    %24 = arith.muli %arg1, %c8_i32 : i32
    %25 = vector.broadcast %24 : i32 to vector<12x1xi32>
    %26 = arith.addi %23, %25 : vector<12x1xi32>
    %c2_i32 = arith.constant 2 : i32
    %27 = vector.broadcast %c2_i32 : i32 to vector<12x1xi32>
    %28 = arith.subi %26, %27 : vector<12x1xi32>
    %c0_i32 = arith.constant 0 : i32
    %29 = vector.broadcast %c0_i32 : i32 to vector<12x1xi32>
    %30 = arith.cmpi sge, %28, %29 : vector<12x1xi32>
    %c16_i32 = arith.constant 16 : i32
    %31 = vector.broadcast %c16_i32 : i32 to vector<12x1xi32>
    %32 = arith.cmpi slt, %28, %31 : vector<12x1xi32>
    %33 = arith.andi %30, %32 : vector<12x1xi1>
    %34 = arith.extui %33 : vector<12x1xi1> to vector<12x1xi32>
    %35 = arith.sitofp %34 : vector<12x1xi32> to vector<12x1xf32>
    %36 = vector.broadcast %35 : vector<12x1xf32> to vector<12x72xf32>
    %37 = arith.mulf %22, %36 : vector<12x72xf32>
    %cst_20 = arith.constant 0.000000e+00 : f32
    %38 = vector.broadcast %cst_20 : f32 to vector<10x72xf32>
    %39 = vector.extract_strided_slice %37 {offsets = [0, 0], sizes = [10, 72], strides = [1, 1]} : vector<12x72xf32> to vector<10x72xf32>
    %c0_21 = arith.constant 0 : index
    %c0_22 = arith.constant 0 : index
    %c0_23 = arith.constant 0 : index
    %40 = vector.load %arg9[%c0_21, %c0_22, %c0_23] : memref<3x72x72xf32, #tpu.memory_space<vmem>>, vector<1x72x72xf32>
    %41 = vector.shape_cast %40 : vector<1x72x72xf32> to vector<72x72xf32>
    %cst_24 = arith.constant dense<0.000000e+00> : vector<10x72xf32>
    %42 = tpu.matmul %39, %41, %cst_24 {dimension_numbers = #tpu.dot_dimension_numbers<[1], [0], [0], [1], [0, 0, 1, 1], [], []>} : vector<10x72xf32>, vector<72x72xf32>, vector<10x72xf32> -> vector<10x72xf32>
    %43 = arith.addf %38, %42 : vector<10x72xf32>
    %44 = vector.extract_strided_slice %37 {offsets = [1, 0], sizes = [10, 72], strides = [1, 1]} : vector<12x72xf32> to vector<10x72xf32>
    %c1 = arith.constant 1 : index
    %c0_25 = arith.constant 0 : index
    %c0_26 = arith.constant 0 : index
    %45 = vector.load %arg9[%c1, %c0_25, %c0_26] : memref<3x72x72xf32, #tpu.memory_space<vmem>>, vector<1x72x72xf32>
    %46 = vector.shape_cast %45 : vector<1x72x72xf32> to vector<72x72xf32>
    %cst_27 = arith.constant dense<0.000000e+00> : vector<10x72xf32>
    %47 = tpu.matmul %44, %46, %cst_27 {dimension_numbers = #tpu.dot_dimension_numbers<[1], [0], [0], [1], [0, 0, 1, 1], [], []>} : vector<10x72xf32>, vector<72x72xf32>, vector<10x72xf32> -> vector<10x72xf32>
    %48 = arith.addf %43, %47 : vector<10x72xf32>
    %49 = vector.extract_strided_slice %37 {offsets = [2, 0], sizes = [10, 72], strides = [1, 1]} : vector<12x72xf32> to vector<10x72xf32>
    %c2_28 = arith.constant 2 : index
    %c0_29 = arith.constant 0 : index
    %c0_30 = arith.constant 0 : index
    %50 = vector.load %arg9[%c2_28, %c0_29, %c0_30] : memref<3x72x72xf32, #tpu.memory_space<vmem>>, vector<1x72x72xf32>
    %51 = vector.shape_cast %50 : vector<1x72x72xf32> to vector<72x72xf32>
    %cst_31 = arith.constant dense<0.000000e+00> : vector<10x72xf32>
    %52 = tpu.matmul %49, %51, %cst_31 {dimension_numbers = #tpu.dot_dimension_numbers<[1], [0], [0], [1], [0, 0, 1, 1], [], []>} : vector<10x72xf32>, vector<72x72xf32>, vector<10x72xf32> -> vector<10x72xf32>
    %53 = arith.addf %48, %52 : vector<10x72xf32>
    %c0_32 = arith.constant 0 : index
    %c0_33 = arith.constant 0 : index
    %54 = vector.load %arg10[%c0_32, %c0_33] : memref<1x72xf32, #tpu.memory_space<vmem>>, vector<1x72xf32>
    %55 = vector.broadcast %54 : vector<1x72xf32> to vector<10x72xf32>
    %56 = arith.addf %53, %55 : vector<10x72xf32>
    %cst_34 = arith.constant 0.000000e+00 : f32
    %57 = vector.broadcast %cst_34 : f32 to vector<10x72xf32>
    %58 = arith.subf %57, %56 : vector<10x72xf32>
    %59 = math.exp %58 : vector<10x72xf32>
    %cst_35 = arith.constant 1.000000e+00 : f32
    %60 = vector.broadcast %cst_35 : f32 to vector<10x72xf32>
    %61 = arith.addf %60, %59 : vector<10x72xf32>
    %cst_36 = arith.constant 1.000000e+00 : f32
    %62 = vector.broadcast %cst_36 : f32 to vector<10x72xf32>
    %63 = arith.divf %62, %61 : vector<10x72xf32>
    %64 = arith.mulf %56, %63 : vector<10x72xf32>
    %65 = tpu.iota {dimensions = array<i32: 0>} : vector<10x1xi32>
    %c8_i32_37 = arith.constant 8 : i32
    %66 = arith.muli %arg1, %c8_i32_37 : i32
    %67 = vector.broadcast %66 : i32 to vector<10x1xi32>
    %68 = arith.addi %65, %67 : vector<10x1xi32>
    %c1_i32 = arith.constant 1 : i32
    %69 = vector.broadcast %c1_i32 : i32 to vector<10x1xi32>
    %70 = arith.subi %68, %69 : vector<10x1xi32>
    %c0_i32_38 = arith.constant 0 : i32
    %71 = vector.broadcast %c0_i32_38 : i32 to vector<10x1xi32>
    %72 = arith.cmpi sge, %70, %71 : vector<10x1xi32>
    %c16_i32_39 = arith.constant 16 : i32
    %73 = vector.broadcast %c16_i32_39 : i32 to vector<10x1xi32>
    %74 = arith.cmpi slt, %70, %73 : vector<10x1xi32>
    %75 = arith.andi %72, %74 : vector<10x1xi1>
    %76 = arith.extui %75 : vector<10x1xi1> to vector<10x1xi32>
    %77 = arith.sitofp %76 : vector<10x1xi32> to vector<10x1xf32>
    %78 = vector.broadcast %77 : vector<10x1xf32> to vector<10x72xf32>
    %79 = arith.mulf %64, %78 : vector<10x72xf32>
    %cst_40 = arith.constant 0.000000e+00 : f32
    %80 = vector.broadcast %cst_40 : f32 to vector<8x64xf32>
    %81 = vector.extract_strided_slice %79 {offsets = [0, 0], sizes = [8, 72], strides = [1, 1]} : vector<10x72xf32> to vector<8x72xf32>
    %c0_41 = arith.constant 0 : index
    %c0_42 = arith.constant 0 : index
    %c0_43 = arith.constant 0 : index
    %82 = vector.load %arg11[%c0_41, %c0_42, %c0_43] : memref<3x72x64xf32, #tpu.memory_space<vmem>>, vector<1x72x64xf32>
    %83 = vector.shape_cast %82 : vector<1x72x64xf32> to vector<72x64xf32>
    %cst_44 = arith.constant dense<0.000000e+00> : vector<8x64xf32>
    %84 = tpu.matmul %81, %83, %cst_44 {dimension_numbers = #tpu.dot_dimension_numbers<[1], [0], [0], [1], [0, 0, 1, 1], [], []>} : vector<8x72xf32>, vector<72x64xf32>, vector<8x64xf32> -> vector<8x64xf32>
    %85 = arith.addf %80, %84 : vector<8x64xf32>
    %86 = vector.extract_strided_slice %79 {offsets = [1, 0], sizes = [8, 72], strides = [1, 1]} : vector<10x72xf32> to vector<8x72xf32>
    %c1_45 = arith.constant 1 : index
    %c0_46 = arith.constant 0 : index
    %c0_47 = arith.constant 0 : index
    %87 = vector.load %arg11[%c1_45, %c0_46, %c0_47] : memref<3x72x64xf32, #tpu.memory_space<vmem>>, vector<1x72x64xf32>
    %88 = vector.shape_cast %87 : vector<1x72x64xf32> to vector<72x64xf32>
    %cst_48 = arith.constant dense<0.000000e+00> : vector<8x64xf32>
    %89 = tpu.matmul %86, %88, %cst_48 {dimension_numbers = #tpu.dot_dimension_numbers<[1], [0], [0], [1], [0, 0, 1, 1], [], []>} : vector<8x72xf32>, vector<72x64xf32>, vector<8x64xf32> -> vector<8x64xf32>
    %90 = arith.addf %85, %89 : vector<8x64xf32>
    %91 = vector.extract_strided_slice %79 {offsets = [2, 0], sizes = [8, 72], strides = [1, 1]} : vector<10x72xf32> to vector<8x72xf32>
    %c2_49 = arith.constant 2 : index
    %c0_50 = arith.constant 0 : index
    %c0_51 = arith.constant 0 : index
    %92 = vector.load %arg11[%c2_49, %c0_50, %c0_51] : memref<3x72x64xf32, #tpu.memory_space<vmem>>, vector<1x72x64xf32>
    %93 = vector.shape_cast %92 : vector<1x72x64xf32> to vector<72x64xf32>
    %cst_52 = arith.constant dense<0.000000e+00> : vector<8x64xf32>
    %94 = tpu.matmul %91, %93, %cst_52 {dimension_numbers = #tpu.dot_dimension_numbers<[1], [0], [0], [1], [0, 0, 1, 1], [], []>} : vector<8x72xf32>, vector<72x64xf32>, vector<8x64xf32> -> vector<8x64xf32>
    %95 = arith.addf %90, %94 : vector<8x64xf32>
    %c0_53 = arith.constant 0 : index
    %c0_54 = arith.constant 0 : index
    %96 = vector.load %arg12[%c0_53, %c0_54] : memref<1x64xf32, #tpu.memory_space<vmem>>, vector<1x64xf32>
    %97 = vector.broadcast %96 : vector<1x64xf32> to vector<8x64xf32>
    %98 = arith.addf %95, %97 : vector<8x64xf32>
    %cst_55 = arith.constant 0.000000e+00 : f32
    %99 = vector.broadcast %cst_55 : f32 to vector<8x64xf32>
    %100 = arith.subf %99, %98 : vector<8x64xf32>
    %101 = math.exp %100 : vector<8x64xf32>
    %cst_56 = arith.constant 1.000000e+00 : f32
    %102 = vector.broadcast %cst_56 : f32 to vector<8x64xf32>
    %103 = arith.addf %102, %101 : vector<8x64xf32>
    %cst_57 = arith.constant 1.000000e+00 : f32
    %104 = vector.broadcast %cst_57 : f32 to vector<8x64xf32>
    %105 = arith.divf %104, %103 : vector<8x64xf32>
    %106 = arith.mulf %98, %105 : vector<8x64xf32>
    %c0_58 = arith.constant 0 : index
    %c0_59 = arith.constant 0 : index
    %107 = vector.load %arg7[%c0_58, %c0_59] : memref<64x64xf32, #tpu.memory_space<vmem>>, vector<64x64xf32>
    %cst_60 = arith.constant dense<0.000000e+00> : vector<8x64xf32>
    %108 = tpu.matmul %1, %107, %cst_60 {dimension_numbers = #tpu.dot_dimension_numbers<[1], [0], [0], [1], [0, 0, 1, 1], [], []>} : vector<8x64xf32>, vector<64x64xf32>, vector<8x64xf32> -> vector<8x64xf32>
    %c0_61 = arith.constant 0 : index
    %c0_62 = arith.constant 0 : index
    %109 = vector.load %arg8[%c0_61, %c0_62] : memref<1x64xf32, #tpu.memory_space<vmem>>, vector<1x64xf32>
    %110 = vector.broadcast %109 : vector<1x64xf32> to vector<8x64xf32>
    %111 = arith.addf %108, %110 : vector<8x64xf32>
    %cst_63 = arith.constant 0.000000e+00 : f32
    %112 = vector.broadcast %cst_63 : f32 to vector<8x64xf32>
    %113 = arith.subf %112, %111 : vector<8x64xf32>
    %114 = math.exp %113 : vector<8x64xf32>
    %cst_64 = arith.constant 1.000000e+00 : f32
    %115 = vector.broadcast %cst_64 : f32 to vector<8x64xf32>
    %116 = arith.addf %115, %114 : vector<8x64xf32>
    %cst_65 = arith.constant 1.000000e+00 : f32
    %117 = vector.broadcast %cst_65 : f32 to vector<8x64xf32>
    %118 = arith.divf %117, %116 : vector<8x64xf32>
    %119 = arith.mulf %111, %118 : vector<8x64xf32>
    %c0_66 = arith.constant 0 : index
    %c0_67 = arith.constant 0 : index
    %120 = vector.load %arg13[%c0_66, %c0_67] : memref<64x128xf32, #tpu.memory_space<vmem>>, vector<64x128xf32>
    %cst_68 = arith.constant dense<0.000000e+00> : vector<8x128xf32>
    %121 = tpu.matmul %106, %120, %cst_68 {dimension_numbers = #tpu.dot_dimension_numbers<[1], [0], [0], [1], [0, 0, 1, 1], [], []>} : vector<8x64xf32>, vector<64x128xf32>, vector<8x128xf32> -> vector<8x128xf32>
    %122 = vector.extract_strided_slice %79 {offsets = [1, 0], sizes = [8, 72], strides = [1, 1]} : vector<10x72xf32> to vector<8x72xf32>
    %c0_69 = arith.constant 0 : index
    %c0_70 = arith.constant 0 : index
    %123 = vector.load %arg14[%c0_69, %c0_70] : memref<72x128xf32, #tpu.memory_space<vmem>>, vector<72x128xf32>
    %cst_71 = arith.constant dense<0.000000e+00> : vector<8x128xf32>
    %124 = tpu.matmul %122, %123, %cst_71 {dimension_numbers = #tpu.dot_dimension_numbers<[1], [0], [0], [1], [0, 0, 1, 1], [], []>} : vector<8x72xf32>, vector<72x128xf32>, vector<8x128xf32> -> vector<8x128xf32>
    %125 = arith.addf %121, %124 : vector<8x128xf32>
    %126 = vector.extract_strided_slice %37 {offsets = [2, 0], sizes = [8, 72], strides = [1, 1]} : vector<12x72xf32> to vector<8x72xf32>
    %c0_72 = arith.constant 0 : index
    %c0_73 = arith.constant 0 : index
    %127 = vector.load %arg15[%c0_72, %c0_73] : memref<72x128xf32, #tpu.memory_space<vmem>>, vector<72x128xf32>
    %cst_74 = arith.constant dense<0.000000e+00> : vector<8x128xf32>
    %128 = tpu.matmul %126, %127, %cst_74 {dimension_numbers = #tpu.dot_dimension_numbers<[1], [0], [0], [1], [0, 0, 1, 1], [], []>} : vector<8x72xf32>, vector<72x128xf32>, vector<8x128xf32> -> vector<8x128xf32>
    %129 = arith.addf %125, %128 : vector<8x128xf32>
    %c0_75 = arith.constant 0 : index
    %c0_76 = arith.constant 0 : index
    %130 = vector.load %arg16[%c0_75, %c0_76] : memref<64x128xf32, #tpu.memory_space<vmem>>, vector<64x128xf32>
    %cst_77 = arith.constant dense<0.000000e+00> : vector<8x128xf32>
    %131 = tpu.matmul %119, %130, %cst_77 {dimension_numbers = #tpu.dot_dimension_numbers<[1], [0], [0], [1], [0, 0, 1, 1], [], []>} : vector<8x64xf32>, vector<64x128xf32>, vector<8x128xf32> -> vector<8x128xf32>
    %132 = arith.addf %129, %131 : vector<8x128xf32>
    %c0_78 = arith.constant 0 : index
    %c0_79 = arith.constant 0 : index
    %133 = vector.load %arg17[%c0_78, %c0_79] : memref<1x128xf32, #tpu.memory_space<vmem>>, vector<1x128xf32>
    %134 = vector.broadcast %133 : vector<1x128xf32> to vector<8x128xf32>
    %135 = arith.addf %132, %134 : vector<8x128xf32>
    %cst_80 = arith.constant 0.000000e+00 : f32
    %136 = vector.broadcast %cst_80 : f32 to vector<8x128xf32>
    %137 = arith.subf %136, %135 : vector<8x128xf32>
    %138 = math.exp %137 : vector<8x128xf32>
    %cst_81 = arith.constant 1.000000e+00 : f32
    %139 = vector.broadcast %cst_81 : f32 to vector<8x128xf32>
    %140 = arith.addf %139, %138 : vector<8x128xf32>
    %cst_82 = arith.constant 1.000000e+00 : f32
    %141 = vector.broadcast %cst_82 : f32 to vector<8x128xf32>
    %142 = arith.divf %141, %140 : vector<8x128xf32>
    %143 = arith.mulf %135, %142 : vector<8x128xf32>
    %c0_83 = arith.constant 0 : index
    %c0_84 = arith.constant 0 : index
    %c0_85 = arith.constant 0 : index
    %144 = vector.load %arg18[%c0_83, %c0_84, %c0_85] : memref<1x8x128xf32, #tpu.memory_space<vmem>>, vector<1x8x128xf32>
    %145 = vector.shape_cast %144 : vector<1x8x128xf32> to vector<8x128xf32>
    %146 = vector.shape_cast %143 : vector<8x128xf32> to vector<1x8x128xf32>
    tpu.vector_store %arg18[%c0_83, %c0_84, %c0_85], %146 {strides = array<i32>} : memref<1x8x128xf32, #tpu.memory_space<vmem>>, vector<1x8x128xf32>,
    return
  }
  func.func @transform_0(%arg0: i32, %arg1: i32) -> (i32, i32, i32) {
    %c0_i32 = arith.constant 0 : i32
    %c0_i32_0 = arith.constant 0 : i32
    return %arg0, %arg1, %c0_i32 : i32, i32, i32
  }
  func.func @transform_1(%arg0: i32, %arg1: i32) -> (i32, i32, i32) {
    %c1_i32 = arith.constant 1 : i32
    %0 = arith.subi %arg1, %c1_i32 : i32
    %c0_i32 = arith.constant 0 : i32
    %1 = arith.maxsi %0, %c0_i32 : i32
    %c0_i32_0 = arith.constant 0 : i32
    %c0_i32_1 = arith.constant 0 : i32
    return %arg0, %1, %c0_i32_0 : i32, i32, i32
  }
  func.func @transform_2(%arg0: i32, %arg1: i32) -> (i32, i32, i32) {
    %c1_i32 = arith.constant 1 : i32
    %0 = arith.addi %arg1, %c1_i32 : i32
    %c1_i32_0 = arith.constant 1 : i32
    %1 = arith.minsi %0, %c1_i32_0 : i32
    %c0_i32 = arith.constant 0 : i32
    %c0_i32_1 = arith.constant 0 : i32
    return %arg0, %1, %c0_i32 : i32, i32, i32
  }
  func.func @transform_3(%arg0: i32, %arg1: i32) -> (i32, i32) {
    %c0_i32 = arith.constant 0 : i32
    %c0_i32_0 = arith.constant 0 : i32
    %c0_i32_1 = arith.constant 0 : i32
    return %c0_i32, %c0_i32_0 : i32, i32
  }
  func.func @transform_4(%arg0: i32, %arg1: i32) -> (i32, i32) {
    %c0_i32 = arith.constant 0 : i32
    %c0_i32_0 = arith.constant 0 : i32
    %c0_i32_1 = arith.constant 0 : i32
    return %c0_i32, %c0_i32_0 : i32, i32
  }
  func.func @transform_5(%arg0: i32, %arg1: i32) -> (i32, i32) {
    %c0_i32 = arith.constant 0 : i32
    %c0_i32_0 = arith.constant 0 : i32
    %c0_i32_1 = arith.constant 0 : i32
    return %c0_i32, %c0_i32_0 : i32, i32
  }
  func.func @transform_6(%arg0: i32, %arg1: i32) -> (i32, i32) {
    %c0_i32 = arith.constant 0 : i32
    %c0_i32_0 = arith.constant 0 : i32
    %c0_i32_1 = arith.constant 0 : i32
    return %c0_i32, %c0_i32_0 : i32, i32
  }
  func.func @transform_7(%arg0: i32, %arg1: i32) -> (i32, i32, i32) {
    %c0_i32 = arith.constant 0 : i32
    %c0_i32_0 = arith.constant 0 : i32
    %c0_i32_1 = arith.constant 0 : i32
    %c0_i32_2 = arith.constant 0 : i32
    return %c0_i32, %c0_i32_0, %c0_i32_1 : i32, i32, i32
  }
  func.func @transform_8(%arg0: i32, %arg1: i32) -> (i32, i32) {
    %c0_i32 = arith.constant 0 : i32
    %c0_i32_0 = arith.constant 0 : i32
    %c0_i32_1 = arith.constant 0 : i32
    return %c0_i32, %c0_i32_0 : i32, i32
  }
  func.func @transform_9(%arg0: i32, %arg1: i32) -> (i32, i32, i32) {
    %c0_i32 = arith.constant 0 : i32
    %c0_i32_0 = arith.constant 0 : i32
    %c0_i32_1 = arith.constant 0 : i32
    %c0_i32_2 = arith.constant 0 : i32
    return %c0_i32, %c0_i32_0, %c0_i32_1 : i32, i32, i32
  }
  func.func @transform_10(%arg0: i32, %arg1: i32) -> (i32, i32) {
    %c0_i32 = arith.constant 0 : i32
    %c0_i32_0 = arith.constant 0 : i32
    %c0_i32_1 = arith.constant 0 : i32
    return %c0_i32, %c0_i32_0 : i32, i32
  }
  func.func @transform_11(%arg0: i32, %arg1: i32) -> (i32, i32) {
    %c0_i32 = arith.constant 0 : i32
    %c0_i32_0 = arith.constant 0 : i32
    %c0_i32_1 = arith.constant 0 : i32
    return %c0_i32, %c0_i32_0 : i32, i32
  }
  func.func @transform_12(%arg0: i32, %arg1: i32) -> (i32, i32) {
    %c0_i32 = arith.constant 0 : i32
    %c0_i32_0 = arith.constant 0 : i32
    %c0_i32_1 = arith.constant 0 : i32
    return %c0_i32, %c0_i32_0 : i32, i32
  }
  func.func @transform_13(%arg0: i32, %arg1: i32) -> (i32, i32) {
    %c0_i32 = arith.constant 0 : i32
    %c0_i32_0 = arith.constant 0 : i32
    %c0_i32_1 = arith.constant 0 : i32
    return %c0_i32, %c0_i32_0 : i32, i32
  }
  func.func @transform_14(%arg0: i32, %arg1: i32) -> (i32, i32) {
    %c0_i32 = arith.constant 0 : i32
    %c0_i32_0 = arith.constant 0 : i32
    %c0_i32_1 = arith.constant 0 : i32
    return %c0_i32, %c0_i32_0 : i32, i32
  }
  func.func @transform_15(%arg0: i32, %arg1: i32) -> (i32, i32) {
    %c0_i32 = arith.constant 0 : i32
    %c0_i32_0 = arith.constant 0 : i32
    %c0_i32_1 = arith.constant 0 : i32
    return %c0_i32, %c0_i32_0 : i32, i32
  }
  func.func @transform_16(%arg0: i32, %arg1: i32) -> (i32, i32, i32) {
    %c0_i32 = arith.constant 0 : i32
    %c0_i32_0 = arith.constant 0 : i32
    return %arg0, %arg1, %c0_i32 : i32, i32, i32
  }
}

</mosaic_0001>

<llo_original>
// kernel: elan_forward.1
$region0: #{elan_forward.1}
  #allocation0 [shape = 'u32[]', space=smem, size = 0x4, offset = 0x4, fixed_abs, tag = 'smem constant byte address 0x4 - core index']
  #allocation1 [shape = 'u32[144,128]{1,0:T(1,128)}', space=vmem, size = 0x12000, scoped, tag = 'internal scratch']
  #allocation2 [shape = 'f32[12,64]{1,0:T(8,128)}', space=vmem, size = 0x2000, scoped, tag = 'scratch operand']
  %s0 = inlined_call_operand.vmem [shape: f32[2,16,64], index: 0, kind: input, shape index: {}, may-alias: {0,1,2}]
  %s1 = inlined_call_operand.vmem [shape: f32[2,16,64], index: 1, kind: input, shape index: {}, may-alias: {0,1,2}]
  %s2 = inlined_call_operand.vmem [shape: f32[2,16,64], index: 2, kind: input, shape index: {}, may-alias: {0,1,2}]
  %s3 = inlined_call_operand.vmem [shape: f32[64,72], index: 3, kind: input, shape index: {}]
  %s4 = inlined_call_operand.vmem [shape: f32[1,72], index: 4, kind: input, shape index: {}]
  %s5 = inlined_call_operand.vmem [shape: f32[64,64], index: 5, kind: input, shape index: {}]
  %s6 = inlined_call_operand.vmem [shape: f32[1,64], index: 6, kind: input, shape index: {}]
  %s7 = inlined_call_operand.vmem [shape: f32[3,72,72], index: 7, kind: input, shape index: {}]
  %s8 = inlined_call_operand.vmem [shape: f32[1,72], index: 8, kind: input, shape index: {}]
  %s9 = inlined_call_operand.vmem [shape: f32[3,72,64], index: 9, kind: input, shape index: {}]
  %s10 = inlined_call_operand.vmem [shape: f32[1,64], index: 10, kind: input, shape index: {}]
  %s11 = inlined_call_operand.vmem [shape: f32[64,128], index: 11, kind: input, shape index: {}]
  %s12 = inlined_call_operand.vmem [shape: f32[72,128], index: 12, kind: input, shape index: {}]
  %s13 = inlined_call_operand.vmem [shape: f32[72,128], index: 13, kind: input, shape index: {}]
  %s14 = inlined_call_operand.vmem [shape: f32[64,128], index: 14, kind: input, shape index: {}]
  %s15 = inlined_call_operand.vmem [shape: f32[1,128], index: 15, kind: input, shape index: {}]
  %s16 = inlined_call_operand.vmem [shape: f32[2,16,128], index: 16, kind: output, shape index: {}]
  %s17 = sld [smem:[#allocation0]]
  $region97: #{elan_forward.1} parent=0
    _
  %s19 = ssub.s32 1, %s17
  %s20 = scalar_select 0, %s19, %s17
  loop: start=0, step=1, limit=6
  $region2: #{elan_forward.1} parent=0 // loop_pre_header
    _
  $region3: #{elan_forward.1} parent=0 // loop_header
    %s22 = sphi 0, %s26
    %p23 = scmp.ge.s32.totalorder %s22, 6
    %s29 = sphi 0, %s41
    %s30 = sphi 0, %s37
    %s31 = sphi 0, %s29
    %s32 = sphi 0, %s30
    %s33 = sphi 0, %s31
    %s34 = sphi 0, %s32
    %s46 = sphi 0, %s48
    %s49 = sphi 0, %s46
    %s50 = sphi 0, %s49
    %s66 = sphi 0, %s50
    %s80 = sphi 0, %s82
    %s83 = sphi 0, %s80
    %s84 = sphi 0, %s83
    %s100 = sphi 0, %s84
    %s114 = sphi 0, %s116
    %s117 = sphi 0, %s114
    %s118 = sphi 0, %s117
    %s134 = sphi 0, %s118
    %s138 = sphi 0, %s138
    %s140 = sphi 0, %s138
    %s141 = sphi 0, %s140
    %s155 = sphi 0, %s141
    %s159 = sphi 0, %s159
    %s161 = sphi 0, %s159
    %s162 = sphi 0, %s161
    %s176 = sphi 0, %s162
    %s180 = sphi 0, %s180
    %s182 = sphi 0, %s180
    %s183 = sphi 0, %s182
    %s197 = sphi 0, %s183
    %s201 = sphi 0, %s201
    %s203 = sphi 0, %s201
    %s204 = sphi 0, %s203
    %s218 = sphi 0, %s204
    %s222 = sphi 0, %s222
    %s224 = sphi 0, %s222
    %s225 = sphi 0, %s224
    %s239 = sphi 0, %s225
    %s243 = sphi 0, %s243
    %s245 = sphi 0, %s243
    %s246 = sphi 0, %s245
    %s260 = sphi 0, %s246
    %s264 = sphi 0, %s264
    %s266 = sphi 0, %s264
    %s267 = sphi 0, %s266
    %s281 = sphi 0, %s267
    %s285 = sphi 0, %s285
    %s287 = sphi 0, %s285
    %s288 = sphi 0, %s287
    %s302 = sphi 0, %s288
    %s306 = sphi 0, %s306
    %s308 = sphi 0, %s306
    %s309 = sphi 0, %s308
    %s323 = sphi 0, %s309
    %s327 = sphi 0, %s327
    %s329 = sphi 0, %s327
    %s330 = sphi 0, %s329
    %s344 = sphi 0, %s330
    %s348 = sphi 0, %s348
    %s350 = sphi 0, %s348
    %s351 = sphi 0, %s350
    %s365 = sphi 0, %s351
    %s369 = sphi 0, %s369
    %s371 = sphi 0, %s369
    %s372 = sphi 0, %s371
    %s386 = sphi 0, %s372
    %s390 = sphi 0, %s390
    %s392 = sphi 0, %s390
    %s393 = sphi 0, %s392
    %s407 = sphi 0, %s393
    %s415 = sphi 0, %s417
    %s418 = sphi 0, %s415
    %s419 = sphi 0, %s418
    %s435 = sphi 0, %s419
  $region4: #{elan_forward.1} parent=0 // loop_header_branch
    %25 = sbr.rel (%p23) target = $region8
  $region5: #{elan_forward.1} parent=0 // loop_body
    %s27 = ssub.s32 %s22, 1
    %s28 = ssub.s32 %s22, 2
    %s35 = sadd.s32 1, %s30
    %p36 = scmp.ge.s32.totalorder %s35, 2
    %s37 = scalar_select %p36, 0, %s35
    %s38 = sadd.s32 1, %s29
    %s39 = scalar_select %p36, %s38, %s29
    %p40 = scmp.ge.s32.totalorder %s39, 2
    %s41 = scalar_select %p40, 0, %s39
    %s42 = ssub.s32 %s29, %s41
    %s43 = ssub.s32 %s30, %s37
    %s44 = sor.u32 %s42, %s43
    %p45 = scmp.eq.s32.totalorder %s44, 0
    %s47 = sadd.s32 %s46, 1
    %s48 = scalar_select %p45, %s46, %s47
    %p51 = pneg %p45
    %p52 = scmp.eq.s32.totalorder %s22, 3
    %p53 = por %p51, %p52
    %p54 = scmp.ne.s32.totalorder %s46, %s49
    %p55 = scmp.eq.s32.totalorder %s22, 0
    %p56 = por %p54, %p55
    %p57 = scmp.ne.s32.totalorder %s46, %s49
    %p58 = scmp.eq.s32.totalorder %s27, 3
    %p59 = por %p57, %p58
    %p60 = scmp.ne.s32.totalorder %s49, %s50
    %p61 = scmp.eq.s32.totalorder %s27, 0
    %p62 = por %p60, %p61
    %p63 = scmp.ne.s32.totalorder %s49, %s50
    %p64 = scmp.eq.s32.totalorder %s28, 3
    %p65 = por %p63, %p64
    %p67 = scmp.ne.s32.totalorder %s50, %s66
    %p68 = scmp.eq.s32.totalorder %s28, 0
    %p69 = por %p67, %p68
    %s70 = ssub.s32 %s30, 1
    %p71 = scmp.gt.s32.totalorder %s70, 0
    %s72 = scalar_select %p71, %s70, 0
    %s73 = ssub.s32 %s37, 1
    %p74 = scmp.gt.s32.totalorder %s73, 0
    %s75 = scalar_select %p74, %s73, 0
    %s76 = ssub.s32 %s29, %s41
    %s77 = ssub.s32 %s72, %s75
    %s78 = sor.u32 %s76, %s77
    %p79 = scmp.eq.s32.totalorder %s78, 0
    %s81 = sadd.s32 %s80, 1
    %s82 = scalar_select %p79, %s80, %s81
    %p85 = pneg %p79
    %p86 = scmp.eq.s32.totalorder %s22, 3
    %p87 = por %p85, %p86
    %p88 = scmp.ne.s32.totalorder %s80, %s83
    %p89 = scmp.eq.s32.totalorder %s22, 0
    %p90 = por %p88, %p89
    %p91 = scmp.ne.s32.totalorder %s80, %s83
    %p92 = scmp.eq.s32.totalorder %s27, 3
    %p93 = por %p91, %p92
    %p94 = scmp.ne.s32.totalorder %s83, %s84
    %p95 = scmp.eq.s32.totalorder %s27, 0
    %p96 = por %p94, %p95
    %p97 = scmp.ne.s32.totalorder %s83, %s84
    %p98 = scmp.eq.s32.totalorder %s28, 3
    %p99 = por %p97, %p98
    %p101 = scmp.ne.s32.totalorder %s84, %s100
    %p102 = scmp.eq.s32.totalorder %s28, 0
    %p103 = por %p101, %p102
    %s104 = sadd.s32 %s30, 1
    %p105 = scmp.lt.s32.totalorder %s104, 1
    %s106 = scalar_select %p105, %s104, 1
    %s107 = sadd.s32 %s37, 1
    %p108 = scmp.lt.s32.totalorder %s107, 1
    %s109 = scalar_select %p108, %s107, 1
    %s110 = ssub.s32 %s29, %s41
    %s111 = ssub.s32 %s106, %s109
    %s112 = sor.u32 %s110, %s111
    %p113 = scmp.eq.s32.totalorder %s112, 0
    %s115 = sadd.s32 %s114, 1
    %s116 = scalar_select %p113, %s114, %s115
    %p119 = pneg %p113
    %p120 = scmp.eq.s32.totalorder %s22, 3
    %p121 = por %p119, %p120
    %p122 = scmp.ne.s32.totalorder %s114, %s117
    %p123 = scmp.eq.s32.totalorder %s22, 0
    %p124 = por %p122, %p123
    %p125 = scmp.ne.s32.totalorder %s114, %s117
    %p126 = scmp.eq.s32.totalorder %s27, 3
    %p127 = por %p125, %p126
    %p128 = scmp.ne.s32.totalorder %s117, %s118
    %p129 = scmp.eq.s32.totalorder %s27, 0
    %p130 = por %p128, %p129
    %p131 = scmp.ne.s32.totalorder %s117, %s118
    %p132 = scmp.eq.s32.totalorder %s28, 3
    %p133 = por %p131, %p132
    %p135 = scmp.ne.s32.totalorder %s118, %s134
    %p136 = scmp.eq.s32.totalorder %s28, 0
    %p137 = por %p135, %p136
    %s139 = sadd.s32 %s138, 1
    %p142 = scmp.eq.s32.totalorder %s22, 3
    %p143 = scmp.ne.s32.totalorder %s138, %s140
    %p144 = scmp.eq.s32.totalorder %s22, 0
    %p145 = por %p143, %p144
    %p146 = scmp.ne.s32.totalorder %s138, %s140
    %p147 = scmp.eq.s32.totalorder %s27, 3
    %p148 = por %p146, %p147
    %p149 = scmp.ne.s32.totalorder %s140, %s141
    %p150 = scmp.eq.s32.totalorder %s27, 0
    %p151 = por %p149, %p150
    %p152 = scmp.ne.s32.totalorder %s140, %s141
    %p153 = scmp.eq.s32.totalorder %s28, 3
    %p154 = por %p152, %p153
    %p156 = scmp.ne.s32.totalorder %s141, %s155
    %p157 = scmp.eq.s32.totalorder %s28, 0
    %p158 = por %p156, %p157
    %s160 = sadd.s32 %s159, 1
    %p163 = scmp.eq.s32.totalorder %s22, 3
    %p164 = scmp.ne.s32.totalorder %s159, %s161
    %p165 = scmp.eq.s32.totalorder %s22, 0
    %p166 = por %p164, %p165
    %p167 = scmp.ne.s32.totalorder %s159, %s161
    %p168 = scmp.eq.s32.totalorder %s27, 3
    %p169 = por %p167, %p168
    %p170 = scmp.ne.s32.totalorder %s161, %s162
    %p171 = scmp.eq.s32.totalorder %s27, 0
    %p172 = por %p170, %p171
    %p173 = scmp.ne.s32.totalorder %s161, %s162
    %p174 = scmp.eq.s32.totalorder %s28, 3
    %p175 = por %p173, %p174
    %p177 = scmp.ne.s32.totalorder %s162, %s176
    %p178 = scmp.eq.s32.totalorder %s28, 0
    %p179 = por %p177, %p178
    %s181 = sadd.s32 %s180, 1
    %p184 = scmp.eq.s32.totalorder %s22, 3
    %p185 = scmp.ne.s32.totalorder %s180, %s182
    %p186 = scmp.eq.s32.totalorder %s22, 0
    %p187 = por %p185, %p186
    %p188 = scmp.ne.s32.totalorder %s180, %s182
    %p189 = scmp.eq.s32.totalorder %s27, 3
    %p190 = por %p188, %p189
    %p191 = scmp.ne.s32.totalorder %s182, %s183
    %p192 = scmp.eq.s32.totalorder %s27, 0
    %p193 = por %p191, %p192
    %p194 = scmp.ne.s32.totalorder %s182, %s183
    %p195 = scmp.eq.s32.totalorder %s28, 3
    %p196 = por %p194, %p195
    %p198 = scmp.ne.s32.totalorder %s183, %s197
    %p199 = scmp.eq.s32.totalorder %s28, 0
    %p200 = por %p198, %p199
    %s202 = sadd.s32 %s201, 1
    %p205 = scmp.eq.s32.totalorder %s22, 3
    %p206 = scmp.ne.s32.totalorder %s201, %s203
    %p207 = scmp.eq.s32.totalorder %s22, 0
    %p208 = por %p206, %p207
    %p209 = scmp.ne.s32.totalorder %s201, %s203
    %p210 = scmp.eq.s32.totalorder %s27, 3
    %p211 = por %p209, %p210
    %p212 = scmp.ne.s32.totalorder %s203, %s204
    %p213 = scmp.eq.s32.totalorder %s27, 0
    %p214 = por %p212, %p213
    %p215 = scmp.ne.s32.totalorder %s203, %s204
    %p216 = scmp.eq.s32.totalorder %s28, 3
    %p217 = por %p215, %p216
    %p219 = scmp.ne.s32.totalorder %s204, %s218
    %p220 = scmp.eq.s32.totalorder %s28, 0
    %p221 = por %p219, %p220
    %s223 = sadd.s32 %s222, 1
    %p226 = scmp.eq.s32.totalorder %s22, 3
    %p227 = scmp.ne.s32.totalorder %s222, %s224
    %p228 = scmp.eq.s32.totalorder %s22, 0
    %p229 = por %p227, %p228
    %p230 = scmp.ne.s32.totalorder %s222, %s224
    %p231 = scmp.eq.s32.totalorder %s27, 3
    %p232 = por %p230, %p231
    %p233 = scmp.ne.s32.totalorder %s224, %s225
    %p234 = scmp.eq.s32.totalorder %s27, 0
    %p235 = por %p233, %p234
    %p236 = scmp.ne.s32.totalorder %s224, %s225
    %p237 = scmp.eq.s32.totalorder %s28, 3
    %p238 = por %p236, %p237
    %p240 = scmp.ne.s32.totalorder %s225, %s239
    %p241 = scmp.eq.s32.totalorder %s28, 0
    %p242 = por %p240, %p241
    %s244 = sadd.s32 %s243, 1
    %p247 = scmp.eq.s32.totalorder %s22, 3
    %p248 = scmp.ne.s32.totalorder %s243, %s245
    %p249 = scmp.eq.s32.totalorder %s22, 0
    %p250 = por %p248, %p249
    %p251 = scmp.ne.s32.totalorder %s243, %s245
    %p252 = scmp.eq.s32.totalorder %s27, 3
    %p253 = por %p251, %p252
    %p254 = scmp.ne.s32.totalorder %s245, %s246
    %p255 = scmp.eq.s32.totalorder %s27, 0
    %p256 = por %p254, %p255
    %p257 = scmp.ne.s32.totalorder %s245, %s246
    %p258 = scmp.eq.s32.totalorder %s28, 3
    %p259 = por %p257, %p258
    %p261 = scmp.ne.s32.totalorder %s246, %s260
    %p262 = scmp.eq.s32.totalorder %s28, 0
    %p263 = por %p261, %p262
    %s265 = sadd.s32 %s264, 1
    %p268 = scmp.eq.s32.totalorder %s22, 3
    %p269 = scmp.ne.s32.totalorder %s264, %s266
    %p270 = scmp.eq.s32.totalorder %s22, 0
    %p271 = por %p269, %p270
    %p272 = scmp.ne.s32.totalorder %s264, %s266
    %p273 = scmp.eq.s32.totalorder %s27, 3
    %p274 = por %p272, %p273
    %p275 = scmp.ne.s32.totalorder %s266, %s267
    %p276 = scmp.eq.s32.totalorder %s27, 0
    %p277 = por %p275, %p276
    %p278 = scmp.ne.s32.totalorder %s266, %s267
    %p279 = scmp.eq.s32.totalorder %s28, 3
    %p280 = por %p278, %p279
    %p282 = scmp.ne.s32.totalorder %s267, %s281
    %p283 = scmp.eq.s32.totalorder %s28, 0
    %p284 = por %p282, %p283
    %s286 = sadd.s32 %s285, 1
    %p289 = scmp.eq.s32.totalorder %s22, 3
    %p290 = scmp.ne.s32.totalorder %s285, %s287
    %p291 = scmp.eq.s32.totalorder %s22, 0
    %p292 = por %p290, %p291
    %p293 = scmp.ne.s32.totalorder %s285, %s287
    %p294 = scmp.eq.s32.totalorder %s27, 3
    %p295 = por %p293, %p294
    %p296 = scmp.ne.s32.totalorder %s287, %s288
    %p297 = scmp.eq.s32.totalorder %s27, 0
    %p298 = por %p296, %p297
    %p299 = scmp.ne.s32.totalorder %s287, %s288
    %p300 = scmp.eq.s32.totalorder %s28, 3
    %p301 = por %p299, %p300
    %p303 = scmp.ne.s32.totalorder %s288, %s302
    %p304 = scmp.eq.s32.totalorder %s28, 0
    %p305 = por %p303, %p304
    %s307 = sadd.s32 %s306, 1
    %p310 = scmp.eq.s32.totalorder %s22, 3
    %p311 = scmp.ne.s32.totalorder %s306, %s308
    %p312 = scmp.eq.s32.totalorder %s22, 0
    %p313 = por %p311, %p312
    %p314 = scmp.ne.s32.totalorder %s306, %s308
    %p315 = scmp.eq.s32.totalorder %s27, 3
    %p316 = por %p314, %p315
    %p317 = scmp.ne.s32.totalorder %s308, %s309
    %p318 = scmp.eq.s32.totalorder %s27, 0
    %p319 = por %p317, %p318
    %p320 = scmp.ne.s32.totalorder %s308, %s309
    %p321 = scmp.eq.s32.totalorder %s28, 3
    %p322 = por %p320, %p321
    %p324 = scmp.ne.s32.totalorder %s309, %s323
    %p325 = scmp.eq.s32.totalorder %s28, 0
    %p326 = por %p324, %p325
    %s328 = sadd.s32 %s327, 1
    %p331 = scmp.eq.s32.totalorder %s22, 3
    %p332 = scmp.ne.s32.totalorder %s327, %s329
    %p333 = scmp.eq.s32.totalorder %s22, 0
    %p334 = por %p332, %p333
    %p335 = scmp.ne.s32.totalorder %s327, %s329
    %p336 = scmp.eq.s32.totalorder %s27, 3
    %p337 = por %p335, %p336
    %p338 = scmp.ne.s32.totalorder %s329, %s330
    %p339 = scmp.eq.s32.totalorder %s27, 0
    %p340 = por %p338, %p339
    %p341 = scmp.ne.s32.totalorder %s329, %s330
    %p342 = scmp.eq.s32.totalorder %s28, 3
    %p343 = por %p341, %p342
    %p345 = scmp.ne.s32.totalorder %s330, %s344
    %p346 = scmp.eq.s32.totalorder %s28, 0
    %p347 = por %p345, %p346
    %s349 = sadd.s32 %s348, 1
    %p352 = scmp.eq.s32.totalorder %s22, 3
    %p353 = scmp.ne.s32.totalorder %s348, %s350
    %p354 = scmp.eq.s32.totalorder %s22, 0
    %p355 = por %p353, %p354
    %p356 = scmp.ne.s32.totalorder %s348, %s350
    %p357 = scmp.eq.s32.totalorder %s27, 3
    %p358 = por %p356, %p357
    %p359 = scmp.ne.s32.totalorder %s350, %s351
    %p360 = scmp.eq.s32.totalorder %s27, 0
    %p361 = por %p359, %p360
    %p362 = scmp.ne.s32.totalorder %s350, %s351
    %p363 = scmp.eq.s32.totalorder %s28, 3
    %p364 = por %p362, %p363
    %p366 = scmp.ne.s32.totalorder %s351, %s365
    %p367 = scmp.eq.s32.totalorder %s28, 0
    %p368 = por %p366, %p367
    %s370 = sadd.s32 %s369, 1
    %p373 = scmp.eq.s32.totalorder %s22, 3
    %p374 = scmp.ne.s32.totalorder %s369, %s371
    %p375 = scmp.eq.s32.totalorder %s22, 0
    %p376 = por %p374, %p375
    %p377 = scmp.ne.s32.totalorder %s369, %s371
    %p378 = scmp.eq.s32.totalorder %s27, 3
    %p379 = por %p377, %p378
    %p380 = scmp.ne.s32.totalorder %s371, %s372
    %p381 = scmp.eq.s32.totalorder %s27, 0
    %p382 = por %p380, %p381
    %p383 = scmp.ne.s32.totalorder %s371, %s372
    %p384 = scmp.eq.s32.totalorder %s28, 3
    %p385 = por %p383, %p384
    %p387 = scmp.ne.s32.totalorder %s372, %s386
    %p388 = scmp.eq.s32.totalorder %s28, 0
    %p389 = por %p387, %p388
    %s391 = sadd.s32 %s390, 1
    %p394 = scmp.eq.s32.totalorder %s22, 3
    %p395 = scmp.ne.s32.totalorder %s390, %s392
    %p396 = scmp.eq.s32.totalorder %s22, 0
    %p397 = por %p395, %p396
    %p398 = scmp.ne.s32.totalorder %s390, %s392
    %p399 = scmp.eq.s32.totalorder %s27, 3
    %p400 = por %p398, %p399
    %p401 = scmp.ne.s32.totalorder %s392, %s393
    %p402 = scmp.eq.s32.totalorder %s27, 0
    %p403 = por %p401, %p402
    %p404 = scmp.ne.s32.totalorder %s392, %s393
    %p405 = scmp.eq.s32.totalorder %s28, 3
    %p406 = por %p404, %p405
    %p408 = scmp.ne.s32.totalorder %s393, %s407
    %p409 = scmp.eq.s32.totalorder %s28, 0
    %p410 = por %p408, %p409
    %s411 = ssub.s32 %s29, %s41
    %s412 = ssub.s32 %s30, %s37
    %s413 = sor.u32 %s411, %s412
    %p414 = scmp.eq.s32.totalorder %s413, 0
    %s416 = sadd.s32 %s415, 1
    %s417 = scalar_select %p414, %s415, %s416
    %p420 = pneg %p414
    %p421 = scmp.eq.s32.totalorder %s22, 3
    %p422 = por %p420, %p421
    %p423 = scmp.ne.s32.totalorder %s415, %s418
    %p424 = scmp.eq.s32.totalorder %s22, 0
    %p425 = por %p423, %p424
    %p426 = scmp.ne.s32.totalorder %s415, %s418
    %p427 = scmp.eq.s32.totalorder %s27, 3
    %p428 = por %p426, %p427
    %p429 = scmp.ne.s32.totalorder %s418, %s419
    %p430 = scmp.eq.s32.totalorder %s27, 0
    %p431 = por %p429, %p430
    %p432 = scmp.ne.s32.totalorder %s418, %s419
    %p433 = scmp.eq.s32.totalorder %s28, 3
    %p434 = por %p432, %p433
    %p436 = scmp.ne.s32.totalorder %s419, %s435
    %p437 = scmp.eq.s32.totalorder %s28, 0
    %p438 = por %p436, %p437
    %p439 = scmp.le.s32.totalorder 1, %s22
    %p440 = scmp.lt.s32.totalorder %s22, 5
    %p441 = pnand %p439, %p440
    %p442 = pneg %p441
    // Predicated region
    $region9: #{elan_forward.1} parent=5 // pred_check
      _
    $region10: #{elan_forward.1} parent=5 // pred_check_branch
      %444 = sbr.rel (%p441) target = $region12
    $region11: #{elan_forward.1} parent=5 // pred_region
      %s445 = ssub.s32 %s22, 1
      // Predicated region
      $region13: #{elan_forward.1} parent=11 // pred_check
        %p446 = pneg %p151
      $region14: #{elan_forward.1} parent=11 // pred_check_branch
        %448 = sbr.rel (%p446) target = $region16
      $region15: #{elan_forward.1} parent=11 // pred_region
        _
      $region16: #{elan_forward.1} parent=11 // pred_fallthru
        _
      // Predicated region
      $region17: #{elan_forward.1} parent=11 // pred_check
        %p449 = pneg %p172
      $region18: #{elan_forward.1} parent=11 // pred_check_branch
        %451 = sbr.rel (%p449) target = $region20
      $region19: #{elan_forward.1} parent=11 // pred_region
        _
      $region20: #{elan_forward.1} parent=11 // pred_fallthru
        _
      // Predicated region
      $region21: #{elan_forward.1} parent=11 // pred_check
        %p452 = pneg %p193
      $region22: #{elan_forward.1} parent=11 // pred_check_branch
        %454 = sbr.rel (%p452) target = $region24
      $region23: #{elan_forward.1} parent=11 // pred_region
        _
      $region24: #{elan_forward.1} parent=11 // pred_fallthru
        _
      // Predicated region
      $region25: #{elan_forward.1} parent=11 // pred_check
        %p455 = pneg %p214
      $region26: #{elan_forward.1} parent=11 // pred_check_branch
        %457 = sbr.rel (%p455) target = $region28
      $region27: #{elan_forward.1} parent=11 // pred_region
        _
      $region28: #{elan_forward.1} parent=11 // pred_fallthru
        _
      // Predicated region
      $region29: #{elan_forward.1} parent=11 // pred_check
        %p458 = pneg %p235
      $region30: #{elan_forward.1} parent=11 // pred_check_branch
        %460 = sbr.rel (%p458) target = $region32
      $region31: #{elan_forward.1} parent=11 // pred_region
        _
      $region32: #{elan_forward.1} parent=11 // pred_fallthru
        _
      // Predicated region
      $region33: #{elan_forward.1} parent=11 // pred_check
        %p461 = pneg %p256
      $region34: #{elan_forward.1} parent=11 // pred_check_branch
        %463 = sbr.rel (%p461) target = $region36
      $region35: #{elan_forward.1} parent=11 // pred_region
        _
      $region36: #{elan_forward.1} parent=11 // pred_fallthru
        _
      // Predicated region
      $region37: #{elan_forward.1} parent=11 // pred_check
        %p464 = pneg %p277
      $region38: #{elan_forward.1} parent=11 // pred_check_branch
        %466 = sbr.rel (%p464) target = $region40
      $region39: #{elan_forward.1} parent=11 // pred_region
        _
      $region40: #{elan_forward.1} parent=11 // pred_fallthru
        _
      // Predicated region
      $region41: #{elan_forward.1} parent=11 // pred_check
        %p467 = pneg %p298
      $region42: #{elan_forward.1} parent=11 // pred_check_branch
        %469 = sbr.rel (%p467) target = $region44
      $region43: #{elan_forward.1} parent=11 // pred_region
        _
      $region44: #{elan_forward.1} parent=11 // pred_fallthru
        _
      // Predicated region
      $region45: #{elan_forward.1} parent=11 // pred_check
        %p470 = pneg %p319
      $region46: #{elan_forward.1} parent=11 // pred_check_branch
        %472 = sbr.rel (%p470) target = $region48
      $region47: #{elan_forward.1} parent=11 // pred_region
        _
      $region48: #{elan_forward.1} parent=11 // pred_fallthru
        _
      // Predicated region
      $region49: #{elan_forward.1} parent=11 // pred_check
        %p473 = pneg %p340
      $region50: #{elan_forward.1} parent=11 // pred_check_branch
        %475 = sbr.rel (%p473) target = $region52
      $region51: #{elan_forward.1} parent=11 // pred_region
        _
      $region52: #{elan_forward.1} parent=11 // pred_fallthru
        _
      // Predicated region
      $region53: #{elan_forward.1} parent=11 // pred_check
        %p476 = pneg %p361
      $region54: #{elan_forward.1} parent=11 // pred_check_branch
        %478 = sbr.rel (%p476) target = $region56
      $region55: #{elan_forward.1} parent=11 // pred_region
        _
      $region56: #{elan_forward.1} parent=11 // pred_fallthru
        _
      // Predicated region
      $region57: #{elan_forward.1} parent=11 // pred_check
        %p479 = pneg %p382
      $region58: #{elan_forward.1} parent=11 // pred_check_branch
        %481 = sbr.rel (%p479) target = $region60
      $region59: #{elan_forward.1} parent=11 // pred_region
        _
      $region60: #{elan_forward.1} parent=11 // pred_fallthru
        _
      // Predicated region
      $region61: #{elan_forward.1} parent=11 // pred_check
        %p482 = pneg %p403
      $region62: #{elan_forward.1} parent=11 // pred_check_branch
        %484 = sbr.rel (%p482) target = $region64
      $region63: #{elan_forward.1} parent=11 // pred_region
        _
      $region64: #{elan_forward.1} parent=11 // pred_fallthru
        _
    $region12: #{elan_forward.1} parent=5 // pred_fallthru
      _
    %p485 = scmp.lt.s32.totalorder %s22, 4
    // Predicated region
    $region65: #{elan_forward.1} parent=5 // pred_check
      %p486 = pneg %p485
    $region66: #{elan_forward.1} parent=5 // pred_check_branch
      %488 = sbr.rel (%p486) target = $region68
    $region67: #{elan_forward.1} parent=5 // pred_region
      // Predicated region
      $region69: #{elan_forward.1} parent=67 // pred_check
        %p489 = pneg %p56
      $region70: #{elan_forward.1} parent=67 // pred_check_branch
        %491 = sbr.rel (%p489) target = $region72
      $region71: #{elan_forward.1} parent=67 // pred_region
        %p492 = scmp.lt.s32.totalorder %s29, 1
        %s493 = scalar_select %p492, %s29, 1
        %p494 = scmp.lt.s32.totalorder %s30, 1
        %s495 = scalar_select %p494, %s30, 1
        %s496 = smul.addr %s493, 2
        %s497 = sadd.s32 %s495, %s496
        %s498 = smul.addr %s497, 8
        %s499 = scalar_lea.vmem %s0, %s498
      $region72: #{elan_forward.1} parent=67 // pred_fallthru
        _
      // Predicated region
      $region73: #{elan_forward.1} parent=67 // pred_check
        %p500 = pneg %p90
      $region74: #{elan_forward.1} parent=67 // pred_check_branch
        %502 = sbr.rel (%p500) target = $region76
      $region75: #{elan_forward.1} parent=67 // pred_region
        %s503 = ssub.s32 %s30, 1
        %p504 = scmp.gt.s32.totalorder %s503, 0
        %s505 = scalar_select %p504, %s503, 0
        %p506 = scmp.lt.s32.totalorder %s29, 1
        %s507 = scalar_select %p506, %s29, 1
        %p508 = scmp.lt.s32.totalorder %s505, 1
        %s509 = scalar_select %p508, %s505, 1
        %s510 = smul.addr %s507, 2
        %s511 = sadd.s32 %s509, %s510
        %s512 = smul.addr %s511, 8
        %s513 = scalar_lea.vmem %s1, %s512
        %s514 = ssub.s32 %s30, 1
        %p515 = scmp.gt.s32.totalorder %s514, 0
        %s516 = scalar_select %p515, %s514, 0
      $region76: #{elan_forward.1} parent=67 // pred_fallthru
        _
      // Predicated region
      $region77: #{elan_forward.1} parent=67 // pred_check
        %p517 = pneg %p124
      $region78: #{elan_forward.1} parent=67 // pred_check_branch
        %519 = sbr.rel (%p517) target = $region80
      $region79: #{elan_forward.1} parent=67 // pred_region
        %s520 = sadd.s32 %s30, 1
        %p521 = scmp.lt.s32.totalorder %s520, 1
        %s522 = scalar_select %p521, %s520, 1
        %p523 = scmp.lt.s32.totalorder %s29, 1
        %s524 = scalar_select %p523, %s29, 1
        %p525 = scmp.lt.s32.totalorder %s522, 1
        %s526 = scalar_select %p525, %s522, 1
        %s527 = smul.addr %s524, 2
        %s528 = sadd.s32 %s526, %s527
        %s529 = smul.addr %s528, 8
        %s530 = scalar_lea.vmem %s2, %s529
        %s531 = sadd.s32 %s30, 1
        %p532 = scmp.lt.s32.totalorder %s531, 1
        %s533 = scalar_select %p532, %s531, 1
      $region80: #{elan_forward.1} parent=67 // pred_fallthru
        _
    $region68: #{elan_forward.1} parent=5 // pred_fallthru
      _
    %p534 = scmp.le.s32.totalorder 1, %s22
    %p535 = scmp.lt.s32.totalorder %s22, 5
    %p536 = pnand %p534, %p535
    %p537 = pneg %p536
    // Predicated region
    $region81: #{elan_forward.1} parent=5 // pred_check
      _
    $region82: #{elan_forward.1} parent=5 // pred_check_branch
      %539 = sbr.rel (%p536) target = $region84
    $region83: #{elan_forward.1} parent=5 // pred_region
      %s540 = ssub.s32 %s22, 1
      %p541 = scmp.lt.s32.totalorder %s31, 1
      %s542 = scalar_select %p541, %s31, 1
      %p543 = scmp.lt.s32.totalorder %s32, 1
      %s544 = scalar_select %p543, %s32, 1
      %s545 = smul.addr %s542, 2
      %s546 = sadd.s32 %s544, %s545
      %s547 = smul.addr %s546, 8
      %s548 = scalar_lea.vmem %s0, %s547
      %p549 = pneg %p62
      %p550 = pneg %p59
      %s551 = ssub.s32 %s32, 1
      %p552 = scmp.gt.s32.totalorder %s551, 0
      %s553 = scalar_select %p552, %s551, 0
      %p554 = scmp.lt.s32.totalorder %s31, 1
      %s555 = scalar_select %p554, %s31, 1
      %p556 = scmp.lt.s32.totalorder %s553, 1
      %s557 = scalar_select %p556, %s553, 1
      %s558 = smul.addr %s555, 2
      %s559 = sadd.s32 %s557, %s558
      %s560 = smul.addr %s559, 8
      %s561 = scalar_lea.vmem %s1, %s560
      %p562 = pneg %p96
      %p563 = pneg %p93
      %s564 = sadd.s32 %s32, 1
      %p565 = scmp.lt.s32.totalorder %s564, 1
      %s566 = scalar_select %p565, %s564, 1
      %p567 = scmp.lt.s32.totalorder %s31, 1
      %s568 = scalar_select %p567, %s31, 1
      %p569 = scmp.lt.s32.totalorder %s566, 1
      %s570 = scalar_select %p569, %s566, 1
      %s571 = smul.addr %s568, 2
      %s572 = sadd.s32 %s570, %s571
      %s573 = smul.addr %s572, 8
      %s574 = scalar_lea.vmem %s2, %s573
      %p575 = pneg %p130
      %p576 = pneg %p127
      %p577 = pneg %p151
      %p578 = pneg %p148
      %p579 = pneg %p172
      %p580 = pneg %p169
      %p581 = pneg %p193
      %p582 = pneg %p190
      %p583 = pneg %p214
      %p584 = pneg %p211
      %p585 = pneg %p235
      %p586 = pneg %p232
      %p587 = pneg %p256
      %p588 = pneg %p253
      %p589 = pneg %p277
      %p590 = pneg %p274
      %p591 = pneg %p298
      %p592 = pneg %p295
      %p593 = pneg %p319
      %p594 = pneg %p316
      %p595 = pneg %p340
      %p596 = pneg %p337
      %p597 = pneg %p361
      %p598 = pneg %p358
      %p599 = pneg %p382
      %p600 = pneg %p379
      %p601 = pneg %p403
      %p602 = pneg %p400
      %p603 = pneg %p431
      %p604 = pneg %p428
      %p605 = scmp.lt.s32.totalorder %s31, 1
      %s606 = scalar_select %p605, %s31, 1
      %p607 = scmp.lt.s32.totalorder %s32, 1
      %s608 = scalar_select %p607, %s32, 1
      %s609 = smul.addr %s606, 2
      %s610 = sadd.s32 %s608, %s609
      %s611 = smul.addr %s610, 8
      %s612 = scalar_lea.vmem %s16, %s611
      %p613 = scmp.lt.s32.totalorder %s31, 1
      %s614 = scalar_select %p613, %s31, 1
      %p615 = scmp.lt.s32.totalorder %s32, 1
      %s616 = scalar_select %p615, %s32, 1
      %s617 = smul.addr %s614, 2
      %s618 = sadd.s32 %s616, %s617
      %s619 = smul.addr %s618, 8
      %s620 = scalar_lea.vmem %s0, %s619
      %s621 = ssub.s32 %s32, 1
      %p622 = scmp.gt.s32.totalorder %s621, 0
      %s623 = scalar_select %p622, %s621, 0
      %p624 = scmp.lt.s32.totalorder %s31, 1
      %s625 = scalar_select %p624, %s31, 1
      %p626 = scmp.lt.s32.totalorder %s623, 1
      %s627 = scalar_select %p626, %s623, 1
      %s628 = smul.addr %s625, 2
      %s629 = sadd.s32 %s627, %s628
      %s630 = smul.addr %s629, 8
      %s631 = scalar_lea.vmem %s1, %s630
      %s632 = ssub.s32 %s32, 1
      %p633 = scmp.gt.s32.totalorder %s632, 0
      %s634 = scalar_select %p633, %s632, 0
      %s635 = sadd.s32 %s32, 1
      %p636 = scmp.lt.s32.totalorder %s635, 1
      %s637 = scalar_select %p636, %s635, 1
      %p638 = scmp.lt.s32.totalorder %s31, 1
      %s639 = scalar_select %p638, %s31, 1
      %p640 = scmp.lt.s32.totalorder %s637, 1
      %s641 = scalar_select %p640, %s637, 1
      %s642 = smul.addr %s639, 2
      %s643 = sadd.s32 %s641, %s642
      %s644 = smul.addr %s643, 8
      %s645 = scalar_lea.vmem %s2, %s644
      %s646 = sadd.s32 %s32, 1
      %p647 = scmp.lt.s32.totalorder %s646, 1
      %s648 = scalar_select %p647, %s646, 1
      %p649 = scmp.lt.s32.totalorder %s31, 1
      %s650 = scalar_select %p649, %s31, 1
      %p651 = scmp.lt.s32.totalorder %s32, 1
      %s652 = scalar_select %p651, %s32, 1
      %s653 = smul.addr %s650, 2
      %s654 = sadd.s32 %s652, %s653
      %s655 = smul.addr %s654, 8
      %s656 = scalar_lea.vmem %s16, %s655
      %v657 = vld [vmem:[%s620] sm:$0xff]
      %v658 = vld [vmem:[%s631 + $0x6] sm:$0x3]
      %vm659 = vcmask 517120
      %660 = vst.msk [vmem:[#allocation2] sm:$0x3] %vm659, %v658
      %vm661 = vcmask 523264
      %662 = vst.msk [vmem:[#allocation2 + $0x2] sm:$0xff] %vm661, %v657
      %v663 = vld [vmem:[%s645] sm:$0x3]
      %664 = vst.msk [vmem:[#allocation2 + $0xa] sm:$0x3] %vm659, %v663
      %v665 = vld [vmem:[#allocation2] sm:$0xff]
      %v666 = vld [vmem:[#allocation2 + $0x8] sm:$0xf]
      %v667 = vld [vmem:[%s3] sm:$0xff]
      %v668 = vld [vmem:[%s3 + $0x8] sm:$0xff]
      %v669 = vld [vmem:[%s3 + $0x10] sm:$0xff]
      %v670 = vld [vmem:[%s3 + $0x18] sm:$0xff]
      %v671 = vld [vmem:[%s3 + $0x20] sm:$0xff]
      %v672 = vld [vmem:[%s3 + $0x28] sm:$0xff]
      %v673 = vld [vmem:[%s3 + $0x30] sm:$0xff]
      %v674 = vld [vmem:[%s3 + $0x38] sm:$0xff]
      %v675 = vld [vmem:[%s4] sm:$0x1]
      %v677 = vlaneseq
      %v678 = vshrl.u32 %v677, 7
      %v679 = vsub.s32 0, %v678
      %v680 = vrot.slane %v675, %v679
      %v683 = vsel %vm661, %v665, 0
      %v686 = vsel %vm661, %v666, 0
      %688 = vmatprep.subr.mxu0 0.0
      %689 = vmatpush1.msra.mxu0 0.0
      %690 = vmatprep.subr.mxu0 0.0
      %691 = vmatpush1.msra.mxu0 0.0
      %692 = vmatprep.subr.mxu0 0.0
      %693 = vmatpush1.msra.mxu0 0.0
      %694 = vmatprep.subr.mxu0 0.0
      %695 = vmatpush1.msra.mxu0 0.0
      %696 = vmatprep.subr.mxu0 0.0
      %697 = vmatpush1.msra.mxu0 0.0
      %698 = vmatprep.subr.mxu0 0.0
      %699 = vmatpush1.msra.mxu0 0.0
      %700 = vmatprep.subr.mxu0 0.0
      %701 = vmatpush1.msra.mxu0 0.0
      %702 = vmatprep.subr.mxu0 0.0
      %703 = vmatpush1.msra.mxu0 0.0
      %704 = vmatprep.subr.mxu0 0.0
      %705 = vmatpush1.msra.mxu0 %v674
      %706 = vmatprep.subr.mxu0 0.0
      %707 = vmatpush1.msra.mxu0 %v673
      %708 = vmatprep.subr.mxu0 0.0
      %709 = vmatpush1.msra.mxu0 %v672
      %710 = vmatprep.subr.mxu0 0.0
      %711 = vmatpush1.msra.mxu0 %v671
      %712 = vmatprep.subr.mxu0 0.0
      %713 = vmatpush1.msra.mxu0 %v670
      %714 = vmatprep.subr.mxu0 0.0
      %715 = vmatpush1.msra.mxu0 %v669
      %716 = vmatprep.subr.mxu0 0.0
      %717 = vmatpush1.msra.mxu0 %v668
      %718 = vmatprep.subr.mxu0 0.0
      %719 = vmatpush1.msra.mxu0 %v667
      %720 = vmatprep.subr.mxu0 0.0
      %721 = vmatpush2.msra.mxu0 0.0
      %722 = vmatprep.subr.mxu0 0.0
      %723 = vmatpush2.msra.mxu0 0.0
      %724 = vmatprep.subr.mxu0 0.0
      %725 = vmatpush2.msra.mxu0 0.0
      %726 = vmatprep.subr.mxu0 0.0
      %727 = vmatpush2.msra.mxu0 0.0
      %728 = vmatprep.subr.mxu0 0.0
      %729 = vmatpush2.msra.mxu0 0.0
      %730 = vmatprep.subr.mxu0 0.0
      %731 = vmatpush2.msra.mxu0 0.0
      %732 = vmatprep.subr.mxu0 0.0
      %733 = vmatpush2.msra.mxu0 0.0
      %734 = vmatprep.subr.mxu0 0.0
      %735 = vmatpush2.msra.mxu0 0.0
      %736 = vmatprep.subr.mxu0 0.0
      %737 = vmatpush2.msra.mxu0 0.0
      %738 = vmatprep.subr.mxu0 0.0
      %739 = vmatpush2.msra.mxu0 0.0
      %740 = vmatprep.subr.mxu0 0.0
      %741 = vmatpush2.msra.mxu0 0.0
      %742 = vmatprep.subr.mxu0 0.0
      %743 = vmatpush2.msra.mxu0 0.0
      %744 = vmatprep.subr.mxu0 0.0
      %745 = vmatpush2.msra.mxu0 0.0
      %746 = vmatprep.subr.mxu0 0.0
      %747 = vmatpush2.msra.mxu0 0.0
      %748 = vmatprep.subr.mxu0 0.0
      %749 = vmatpush2.msra.mxu0 0.0
      %750 = vmatprep.subr.mxu0 0.0
      %751 = vmatpush2.msra.mxu0 0.0
      %752 = vmatprep.mubr.f32.mxu0 0.0
      %753 = vmatmul.mubr.f32.gmra.mxu0 %v683
      %v754 = vpop.f32.mrf.mxu0
      %v755 = vadd.f32 %v680, %v754
      %v756 = vpop.f32.mrf.mxu0
      %757 = vmatprep.mubr.f32.mxu0 0.0
      %758 = vmatmul.mubr.f32.gmra.mxu0 %v686
      %v759 = vpop.f32.mrf.mxu0
      %v760 = vadd.f32 %v680, %v759
      %v761 = vpop.f32.mrf.mxu0
      %762 = vdwg.mxu0
      %v763 = vsub.f32 0.0, %v755
      %v764 = vsub.f32 0.0, %v760
      %v765 = vmul.f32 %v763, 1.442695
      %v766 = vpow.pop %v765
      %v767 = vmul.f32 %v764, 1.442695
      %v768 = vpow.pop %v767
      %v769 = vadd.f32 %v766, 1.0
      %v770 = vadd.f32 %v768, 1.0
      %v771 = vrcp.pop %v769
      %v772 = vmul.f32 1.0, %v771
      %v773 = vrcp.pop %v770
      %v774 = vmul.f32 1.0, %v773
      %v775 = vmul.f32 %v755, %v772
      %v776 = vmul.f32 %v760, %v774
      %v777 = vlaneseq
      %v778 = vshrl.u32 %v777, 7
      %v779 = vadd.s32 %v778, 8
      %s780 = smul.u32 %s32, 8
      %v781 = vstv %s780
      %v782 = vadd.s32 %v778, %v781
      %v783 = vadd.s32 %v779, %v781
      %v784 = vsub.s32 %v782, 2
      %v785 = vsub.s32 %v783, 2
      %vm786 = vcmp.ge.s32.totalorder %v784, 0
      %vm787 = vcmp.ge.s32.totalorder %v785, 0
      %vm788 = vcmp.lt.s32.totalorder %v784, 16
      %vm789 = vcmp.lt.s32.totalorder %v785, 16
      %vm790 = vmand %vm786, %vm788
      %vm791 = vmand %vm787, %vm789
      %v792 = vsel %vm790, 1, 0
      %v793 = vsel %vm791, 1, 0
      %v794 = vcvt.s32.f32 %v792
      %v795 = vcvt.s32.f32 %v793
      %v796 = vmul.f32 %v775, %v794
      %v797 = vmul.f32 %v776, %v795
      %v798 = vld [vmem:[%s7] sm:$0xff]
      %v799 = vld [vmem:[%s7 + $0x8] sm:$0xff]
      %v800 = vld [vmem:[%s7 + $0x10] sm:$0xff]
      %v801 = vld [vmem:[%s7 + $0x18] sm:$0xff]
      %v802 = vld [vmem:[%s7 + $0x20] sm:$0xff]
      %v803 = vld [vmem:[%s7 + $0x28] sm:$0xff]
      %v804 = vld [vmem:[%s7 + $0x30] sm:$0xff]
      %v805 = vld [vmem:[%s7 + $0x38] sm:$0xff]
      %v806 = vld [vmem:[%s7 + $0x40] sm:$0xff]
      %s807 = scalar_lea.vmem %s7, 72
      %v808 = vld [vmem:[%s807] sm:$0xff]
      %v809 = vld [vmem:[%s807 + $0x8] sm:$0xff]
      %v810 = vld [vmem:[%s807 + $0x10] sm:$0xff]
      %v811 = vld [vmem:[%s807 + $0x18] sm:$0xff]
      %v812 = vld [vmem:[%s807 + $0x20] sm:$0xff]
      %v813 = vld [vmem:[%s807 + $0x28] sm:$0xff]
      %v814 = vld [vmem:[%s807 + $0x30] sm:$0xff]
      %v815 = vld [vmem:[%s807 + $0x38] sm:$0xff]
      %v816 = vld [vmem:[%s807 + $0x40] sm:$0xff]
      %vm819 = vcmask 1046528
      %v820 = vrot.slane %v796, 1
      %v821 = vrot.slane %v797, 1
      %v822 = vsel %vm819, %v820, %v821
      %vm823 = vcmask 588800
      %v824 = vsel %vm823, %v822, 0
      %v826 = vsel %vm823, %v821, 0
      %828 = vmatprep.subr.mxu0 0.0
      %829 = vmatpush1.msra.mxu0 0.0
      %830 = vmatprep.subr.mxu0 0.0
      %831 = vmatpush1.msra.mxu0 0.0
      %832 = vmatprep.subr.mxu0 0.0
      %833 = vmatpush1.msra.mxu0 0.0
      %834 = vmatprep.subr.mxu0 0.0
      %835 = vmatpush1.msra.mxu0 0.0
      %836 = vmatprep.subr.mxu0 0.0
      %837 = vmatpush1.msra.mxu0 0.0
      %838 = vmatprep.subr.mxu0 0.0
      %839 = vmatpush1.msra.mxu0 0.0
      %840 = vmatprep.subr.mxu0 0.0
      %841 = vmatpush1.msra.mxu0 0.0
      %842 = vmatprep.subr.mxu0 0.0
      %843 = vmatpush1.msra.mxu0 %v816
      %844 = vmatprep.subr.mxu0 0.0
      %845 = vmatpush1.msra.mxu0 %v815
      %846 = vmatprep.subr.mxu0 0.0
      %847 = vmatpush1.msra.mxu0 %v814
      %848 = vmatprep.subr.mxu0 0.0
      %849 = vmatpush1.msra.mxu0 %v813
      %850 = vmatprep.subr.mxu0 0.0
      %851 = vmatpush1.msra.mxu0 %v812
      %852 = vmatprep.subr.mxu0 0.0
      %853 = vmatpush1.msra.mxu0 %v811
      %854 = vmatprep.subr.mxu0 0.0
      %855 = vmatpush1.msra.mxu0 %v810
      %856 = vmatprep.subr.mxu0 0.0
      %857 = vmatpush1.msra.mxu0 %v809
      %858 = vmatprep.subr.mxu0 0.0
      %859 = vmatpush1.msra.mxu0 %v808
      %860 = vmatprep.subr.mxu0 0.0
      %861 = vmatpush2.msra.mxu0 0.0
      %862 = vmatprep.subr.mxu0 0.0
      %863 = vmatpush2.msra.mxu0 0.0
      %864 = vmatprep.subr.mxu0 0.0
      %865 = vmatpush2.msra.mxu0 0.0
      %866 = vmatprep.subr.mxu0 0.0
      %867 = vmatpush2.msra.mxu0 0.0
      %868 = vmatprep.subr.mxu0 0.0
      %869 = vmatpush2.msra.mxu0 0.0
      %870 = vmatprep.subr.mxu0 0.0
      %871 = vmatpush2.msra.mxu0 0.0
      %872 = vmatprep.subr.mxu0 0.0
      %873 = vmatpush2.msra.mxu0 0.0
      %874 = vmatprep.subr.mxu0 0.0
      %875 = vmatpush2.msra.mxu0 0.0
      %876 = vmatprep.subr.mxu0 0.0
      %877 = vmatpush2.msra.mxu0 0.0
      %878 = vmatprep.subr.mxu0 0.0
      %879 = vmatpush2.msra.mxu0 0.0
      %880 = vmatprep.subr.mxu0 0.0
      %881 = vmatpush2.msra.mxu0 0.0
      %882 = vmatprep.subr.mxu0 0.0
      %883 = vmatpush2.msra.mxu0 0.0
      %884 = vmatprep.subr.mxu0 0.0
      %885 = vmatpush2.msra.mxu0 0.0
      %886 = vmatprep.subr.mxu0 0.0
      %887 = vmatpush2.msra.mxu0 0.0
      %888 = vmatprep.subr.mxu0 0.0
      %889 = vmatpush2.msra.mxu0 0.0
      %890 = vmatprep.subr.mxu0 0.0
      %891 = vmatpush2.msra.mxu0 0.0
      %892 = vmatprep.mubr.f32.mxu0 0.0
      %893 = vmatmul.mubr.f32.gmra.mxu0 %v824
      %v894 = vpop.f32.mrf.mxu0
      %v895 = vadd.f32 0.0, %v894
      %v896 = vpop.f32.mrf.mxu0
      %897 = vmatprep.mubr.f32.mxu0 0.0
      %898 = vmatmul.mubr.f32.gmra.mxu0 %v826
      %v899 = vpop.f32.mrf.mxu0
      %v900 = vadd.f32 0.0, %v899
      %v901 = vpop.f32.mrf.mxu0
      %902 = vdwg.mxu0
      %v903 = vsel %vm823, %v796, 0
      %v905 = vsel %vm823, %v797, 0
      %907 = vmatprep.subr.mxu0 0.0
      %908 = vmatpush1.msra.mxu0 0.0
      %909 = vmatprep.subr.mxu0 0.0
      %910 = vmatpush1.msra.mxu0 0.0
      %911 = vmatprep.subr.mxu0 0.0
      %912 = vmatpush1.msra.mxu0 0.0
      %913 = vmatprep.subr.mxu0 0.0
      %914 = vmatpush1.msra.mxu0 0.0
      %915 = vmatprep.subr.mxu0 0.0
      %916 = vmatpush1.msra.mxu0 0.0
      %917 = vmatprep.subr.mxu0 0.0
      %918 = vmatpush1.msra.mxu0 0.0
      %919 = vmatprep.subr.mxu0 0.0
      %920 = vmatpush1.msra.mxu0 0.0
      %921 = vmatprep.subr.mxu0 0.0
      %922 = vmatpush1.msra.mxu0 %v806
      %923 = vmatprep.subr.mxu0 0.0
      %924 = vmatpush1.msra.mxu0 %v805
      %925 = vmatprep.subr.mxu0 0.0
      %926 = vmatpush1.msra.mxu0 %v804
      %927 = vmatprep.subr.mxu0 0.0
      %928 = vmatpush1.msra.mxu0 %v803
      %929 = vmatprep.subr.mxu0 0.0
      %930 = vmatpush1.msra.mxu0 %v802
      %931 = vmatprep.subr.mxu0 0.0
      %932 = vmatpush1.msra.mxu0 %v801
      %933 = vmatprep.subr.mxu0 0.0
      %934 = vmatpush1.msra.mxu0 %v800
      %935 = vmatprep.subr.mxu0 0.0
      %936 = vmatpush1.msra.mxu0 %v799
      %937 = vmatprep.subr.mxu0 0.0
      %938 = vmatpush1.msra.mxu0 %v798
      %939 = vmatprep.subr.mxu0 0.0
      %940 = vmatpush2.msra.mxu0 0.0
      %941 = vmatprep.subr.mxu0 0.0
      %942 = vmatpush2.msra.mxu0 0.0
      %943 = vmatprep.subr.mxu0 0.0
      %944 = vmatpush2.msra.mxu0 0.0
      %945 = vmatprep.subr.mxu0 0.0
      %946 = vmatpush2.msra.mxu0 0.0
      %947 = vmatprep.subr.mxu0 0.0
      %948 = vmatpush2.msra.mxu0 0.0
      %949 = vmatprep.subr.mxu0 0.0
      %950 = vmatpush2.msra.mxu0 0.0
      %951 = vmatprep.subr.mxu0 0.0
      %952 = vmatpush2.msra.mxu0 0.0
      %953 = vmatprep.subr.mxu0 0.0
      %954 = vmatpush2.msra.mxu0 0.0
      %955 = vmatprep.subr.mxu0 0.0
      %956 = vmatpush2.msra.mxu0 0.0
      %957 = vmatprep.subr.mxu0 0.0
      %958 = vmatpush2.msra.mxu0 0.0
      %959 = vmatprep.subr.mxu0 0.0
      %960 = vmatpush2.msra.mxu0 0.0
      %961 = vmatprep.subr.mxu0 0.0
      %962 = vmatpush2.msra.mxu0 0.0
      %963 = vmatprep.subr.mxu0 0.0
      %964 = vmatpush2.msra.mxu0 0.0
      %965 = vmatprep.subr.mxu0 0.0
      %966 = vmatpush2.msra.mxu0 0.0
      %967 = vmatprep.subr.mxu0 0.0
      %968 = vmatpush2.msra.mxu0 0.0
      %969 = vmatprep.subr.mxu0 0.0
      %970 = vmatpush2.msra.mxu0 0.0
      %971 = vmatprep.mubr.f32.mxu0 0.0
      %972 = vmatmul.mubr.f32.gmra.mxu0 %v903
      %v973 = vpop.f32.mrf.mxu0
      %v974 = vadd.f32 %v895, %v973
      %v975 = vpop.f32.mrf.mxu0
      %976 = vmatprep.mubr.f32.mxu0 0.0
      %977 = vmatmul.mubr.f32.gmra.mxu0 %v905
      %v978 = vpop.f32.mrf.mxu0
      %v979 = vadd.f32 %v900, %v978
      %v980 = vpop.f32.mrf.mxu0
      %981 = vdwg.mxu0
      %s982 = scalar_lea.vmem %s7, 144
      %v983 = vld [vmem:[%s982] sm:$0xff]
      %v984 = vld [vmem:[%s982 + $0x8] sm:$0xff]
      %v985 = vld [vmem:[%s982 + $0x10] sm:$0xff]
      %v986 = vld [vmem:[%s982 + $0x18] sm:$0xff]
      %v987 = vld [vmem:[%s982 + $0x20] sm:$0xff]
      %v988 = vld [vmem:[%s982 + $0x28] sm:$0xff]
      %v989 = vld [vmem:[%s982 + $0x30] sm:$0xff]
      %v990 = vld [vmem:[%s982 + $0x38] sm:$0xff]
      %v991 = vld [vmem:[%s982 + $0x40] sm:$0xff]
      %vm992 = vcmask 1045504
      %v993 = vrot.slane %v796, 2
      %v994 = vrot.slane %v797, 2
      %v995 = vsel %vm992, %v993, %v994
      %v996 = vsel %vm823, %v995, 0
      %v998 = vsel %vm823, %v994, 0
      %1000 = vmatprep.subr.mxu0 0.0
      %1001 = vmatpush1.msra.mxu0 0.0
      %1002 = vmatprep.subr.mxu0 0.0
      %1003 = vmatpush1.msra.mxu0 0.0
      %1004 = vmatprep.subr.mxu0 0.0
      %1005 = vmatpush1.msra.mxu0 0.0
      %1006 = vmatprep.subr.mxu0 0.0
      %1007 = vmatpush1.msra.mxu0 0.0
      %1008 = vmatprep.subr.mxu0 0.0
      %1009 = vmatpush1.msra.mxu0 0.0
      %1010 = vmatprep.subr.mxu0 0.0
      %1011 = vmatpush1.msra.mxu0 0.0
      %1012 = vmatprep.subr.mxu0 0.0
      %1013 = vmatpush1.msra.mxu0 0.0
      %1014 = vmatprep.subr.mxu0 0.0
      %1015 = vmatpush1.msra.mxu0 %v991
      %1016 = vmatprep.subr.mxu0 0.0
      %1017 = vmatpush1.msra.mxu0 %v990
      %1018 = vmatprep.subr.mxu0 0.0
      %1019 = vmatpush1.msra.mxu0 %v989
      %1020 = vmatprep.subr.mxu0 0.0
      %1021 = vmatpush1.msra.mxu0 %v988
      %1022 = vmatprep.subr.mxu0 0.0
      %1023 = vmatpush1.msra.mxu0 %v987
      %1024 = vmatprep.subr.mxu0 0.0
      %1025 = vmatpush1.msra.mxu0 %v986
      %1026 = vmatprep.subr.mxu0 0.0
      %1027 = vmatpush1.msra.mxu0 %v985
      %1028 = vmatprep.subr.mxu0 0.0
      %1029 = vmatpush1.msra.mxu0 %v984
      %1030 = vmatprep.subr.mxu0 0.0
      %1031 = vmatpush1.msra.mxu0 %v983
      %1032 = vmatprep.subr.mxu0 0.0
      %1033 = vmatpush2.msra.mxu0 0.0
      %1034 = vmatprep.subr.mxu0 0.0
      %1035 = vmatpush2.msra.mxu0 0.0
      %1036 = vmatprep.subr.mxu0 0.0
      %1037 = vmatpush2.msra.mxu0 0.0
      %1038 = vmatprep.subr.mxu0 0.0
      %1039 = vmatpush2.msra.mxu0 0.0
      %1040 = vmatprep.subr.mxu0 0.0
      %1041 = vmatpush2.msra.mxu0 0.0
      %1042 = vmatprep.subr.mxu0 0.0
      %1043 = vmatpush2.msra.mxu0 0.0
      %1044 = vmatprep.subr.mxu0 0.0
      %1045 = vmatpush2.msra.mxu0 0.0
      %1046 = vmatprep.subr.mxu0 0.0
      %1047 = vmatpush2.msra.mxu0 0.0
      %1048 = vmatprep.subr.mxu0 0.0
      %1049 = vmatpush2.msra.mxu0 0.0
      %1050 = vmatprep.subr.mxu0 0.0
      %1051 = vmatpush2.msra.mxu0 0.0
      %1052 = vmatprep.subr.mxu0 0.0
      %1053 = vmatpush2.msra.mxu0 0.0
      %1054 = vmatprep.subr.mxu0 0.0
      %1055 = vmatpush2.msra.mxu0 0.0
      %1056 = vmatprep.subr.mxu0 0.0
      %1057 = vmatpush2.msra.mxu0 0.0
      %1058 = vmatprep.subr.mxu0 0.0
      %1059 = vmatpush2.msra.mxu0 0.0
      %1060 = vmatprep.subr.mxu0 0.0
      %1061 = vmatpush2.msra.mxu0 0.0
      %1062 = vmatprep.subr.mxu0 0.0
      %1063 = vmatpush2.msra.mxu0 0.0
      %1064 = vmatprep.mubr.f32.mxu0 0.0
      %1065 = vmatmul.mubr.f32.gmra.mxu0 %v996
      %v1066 = vpop.f32.mrf.mxu0
      %v1067 = vadd.f32 0.0, %v1066
      %v1068 = vpop.f32.mrf.mxu0
      %1069 = vmatprep.mubr.f32.mxu0 0.0
      %1070 = vmatmul.mubr.f32.gmra.mxu0 %v998
      %v1071 = vpop.f32.mrf.mxu0
      %v1072 = vadd.f32 0.0, %v1071
      %v1073 = vpop.f32.mrf.mxu0
      %1074 = vdwg.mxu0
      %v1075 = vadd.f32 %v974, %v1067
      %v1076 = vadd.f32 %v979, %v1072
      %v1077 = vld [vmem:[%s8] sm:$0x1]
      %v1079 = vlaneseq
      %v1080 = vshrl.u32 %v1079, 7
      %v1081 = vsub.s32 0, %v1080
      %v1082 = vrot.slane %v1077, %v1081
      %v1084 = vadd.f32 %v1075, %v1082
      %v1085 = vadd.f32 %v1076, %v1082
      %v1086 = vsub.f32 0.0, %v1084
      %v1087 = vsub.f32 0.0, %v1085
      %v1088 = vmul.f32 %v1086, 1.442695
      %v1089 = vpow.pop %v1088
      %v1090 = vmul.f32 %v1087, 1.442695
      %v1091 = vpow.pop %v1090
      %v1092 = vadd.f32 %v1089, 1.0
      %v1093 = vadd.f32 %v1091, 1.0
      %v1094 = vrcp.pop %v1092
      %v1095 = vmul.f32 1.0, %v1094
      %v1096 = vrcp.pop %v1093
      %v1097 = vmul.f32 1.0, %v1096
      %v1098 = vmul.f32 %v1084, %v1095
      %v1099 = vmul.f32 %v1085, %v1097
      %v1100 = vsub.s32 %v782, 1
      %v1101 = vsub.s32 %v783, 1
      %vm1102 = vcmp.ge.s32.totalorder %v1100, 0
      %vm1103 = vcmp.ge.s32.totalorder %v1101, 0
      %vm1104 = vcmp.lt.s32.totalorder %v1100, 16
      %vm1105 = vcmp.lt.s32.totalorder %v1101, 16
      %vm1106 = vmand %vm1102, %vm1104
      %vm1107 = vmand %vm1103, %vm1105
      %v1108 = vsel %vm1106, 1, 0
      %v1109 = vsel %vm1107, 1, 0
      %v1110 = vcvt.s32.f32 %v1108
      %v1111 = vcvt.s32.f32 %v1109
      %v1112 = vmul.f32 %v1098, %v1110
      %v1113 = vmul.f32 %v1099, %v1111
      %v1114 = vld [vmem:[%s9] sm:$0xff]
      %v1115 = vld [vmem:[%s9 + $0x8] sm:$0xff]
      %v1116 = vld [vmem:[%s9 + $0x10] sm:$0xff]
      %v1117 = vld [vmem:[%s9 + $0x18] sm:$0xff]
      %v1118 = vld [vmem:[%s9 + $0x20] sm:$0xff]
      %v1119 = vld [vmem:[%s9 + $0x28] sm:$0xff]
      %v1120 = vld [vmem:[%s9 + $0x30] sm:$0xff]
      %v1121 = vld [vmem:[%s9 + $0x38] sm:$0xff]
      %v1122 = vld [vmem:[%s9 + $0x40] sm:$0xff]
      %s1123 = scalar_lea.vmem %s9, 72
      %v1124 = vld [vmem:[%s1123] sm:$0xff]
      %v1125 = vld [vmem:[%s1123 + $0x8] sm:$0xff]
      %v1126 = vld [vmem:[%s1123 + $0x10] sm:$0xff]
      %v1127 = vld [vmem:[%s1123 + $0x18] sm:$0xff]
      %v1128 = vld [vmem:[%s1123 + $0x20] sm:$0xff]
      %v1129 = vld [vmem:[%s1123 + $0x28] sm:$0xff]
      %v1130 = vld [vmem:[%s1123 + $0x30] sm:$0xff]
      %v1131 = vld [vmem:[%s1123 + $0x38] sm:$0xff]
      %v1132 = vld [vmem:[%s1123 + $0x40] sm:$0xff]
      %v1135 = vrot.slane %v1112, 1
      %v1136 = vrot.slane %v1113, 1
      %v1137 = vsel %vm819, %v1135, %v1136
      %v1138 = vsel %vm823, %v1137, 0
      %1140 = vmatprep.subr.mxu0 0.0
      %1141 = vmatpush1.msra.mxu0 0.0
      %1142 = vmatprep.subr.mxu0 0.0
      %1143 = vmatpush1.msra.mxu0 0.0
      %1144 = vmatprep.subr.mxu0 0.0
      %1145 = vmatpush1.msra.mxu0 0.0
      %1146 = vmatprep.subr.mxu0 0.0
      %1147 = vmatpush1.msra.mxu0 0.0
      %1148 = vmatprep.subr.mxu0 0.0
      %1149 = vmatpush1.msra.mxu0 0.0
      %1150 = vmatprep.subr.mxu0 0.0
      %1151 = vmatpush1.msra.mxu0 0.0
      %1152 = vmatprep.subr.mxu0 0.0
      %1153 = vmatpush1.msra.mxu0 0.0
      %1154 = vmatprep.subr.mxu0 0.0
      %1155 = vmatpush1.msra.mxu0 %v1132
      %1156 = vmatprep.subr.mxu0 0.0
      %1157 = vmatpush1.msra.mxu0 %v1131
      %1158 = vmatprep.subr.mxu0 0.0
      %1159 = vmatpush1.msra.mxu0 %v1130
      %1160 = vmatprep.subr.mxu0 0.0
      %1161 = vmatpush1.msra.mxu0 %v1129
      %1162 = vmatprep.subr.mxu0 0.0
      %1163 = vmatpush1.msra.mxu0 %v1128
      %1164 = vmatprep.subr.mxu0 0.0
      %1165 = vmatpush1.msra.mxu0 %v1127
      %1166 = vmatprep.subr.mxu0 0.0
      %1167 = vmatpush1.msra.mxu0 %v1126
      %1168 = vmatprep.subr.mxu0 0.0
      %1169 = vmatpush1.msra.mxu0 %v1125
      %1170 = vmatprep.subr.mxu0 0.0
      %1171 = vmatpush1.msra.mxu0 %v1124
      %1172 = vmatprep.subr.mxu0 0.0
      %1173 = vmatpush2.msra.mxu0 0.0
      %1174 = vmatprep.subr.mxu0 0.0
      %1175 = vmatpush2.msra.mxu0 0.0
      %1176 = vmatprep.subr.mxu0 0.0
      %1177 = vmatpush2.msra.mxu0 0.0
      %1178 = vmatprep.subr.mxu0 0.0
      %1179 = vmatpush2.msra.mxu0 0.0
      %1180 = vmatprep.subr.mxu0 0.0
      %1181 = vmatpush2.msra.mxu0 0.0
      %1182 = vmatprep.subr.mxu0 0.0
      %1183 = vmatpush2.msra.mxu0 0.0
      %1184 = vmatprep.subr.mxu0 0.0
      %1185 = vmatpush2.msra.mxu0 0.0
      %1186 = vmatprep.subr.mxu0 0.0
      %1187 = vmatpush2.msra.mxu0 0.0
      %1188 = vmatprep.subr.mxu0 0.0
      %1189 = vmatpush2.msra.mxu0 0.0
      %1190 = vmatprep.subr.mxu0 0.0
      %1191 = vmatpush2.msra.mxu0 0.0
      %1192 = vmatprep.subr.mxu0 0.0
      %1193 = vmatpush2.msra.mxu0 0.0
      %1194 = vmatprep.subr.mxu0 0.0
      %1195 = vmatpush2.msra.mxu0 0.0
      %1196 = vmatprep.subr.mxu0 0.0
      %1197 = vmatpush2.msra.mxu0 0.0
      %1198 = vmatprep.subr.mxu0 0.0
      %1199 = vmatpush2.msra.mxu0 0.0
      %1200 = vmatprep.subr.mxu0 0.0
      %1201 = vmatpush2.msra.mxu0 0.0
      %1202 = vmatprep.subr.mxu0 0.0
      %1203 = vmatpush2.msra.mxu0 0.0
      %1204 = vmatprep.mubr.f32.mxu0 0.0
      %1205 = vmatmul.mubr.f32.gmra.mxu0 %v1138
      %v1206 = vpop.f32.mrf.mxu0
      %v1207 = vadd.f32 0.0, %v1206
      %v1208 = vpop.f32.mrf.mxu0
      %1209 = vdwg.mxu0
      %v1210 = vsel %vm823, %v1112, 0
      %1212 = vmatprep.subr.mxu0 0.0
      %1213 = vmatpush1.msra.mxu0 0.0
      %1214 = vmatprep.subr.mxu0 0.0
      %1215 = vmatpush1.msra.mxu0 0.0
      %1216 = vmatprep.subr.mxu0 0.0
      %1217 = vmatpush1.msra.mxu0 0.0
      %1218 = vmatprep.subr.mxu0 0.0
      %1219 = vmatpush1.msra.mxu0 0.0
      %1220 = vmatprep.subr.mxu0 0.0
      %1221 = vmatpush1.msra.mxu0 0.0
      %1222 = vmatprep.subr.mxu0 0.0
      %1223 = vmatpush1.msra.mxu0 0.0
      %1224 = vmatprep.subr.mxu0 0.0
      %1225 = vmatpush1.msra.mxu0 0.0
      %1226 = vmatprep.subr.mxu0 0.0
      %1227 = vmatpush1.msra.mxu0 %v1122
      %1228 = vmatprep.subr.mxu0 0.0
      %1229 = vmatpush1.msra.mxu0 %v1121
      %1230 = vmatprep.subr.mxu0 0.0
      %1231 = vmatpush1.msra.mxu0 %v1120
      %1232 = vmatprep.subr.mxu0 0.0
      %1233 = vmatpush1.msra.mxu0 %v1119
      %1234 = vmatprep.subr.mxu0 0.0
      %1235 = vmatpush1.msra.mxu0 %v1118
      %1236 = vmatprep.subr.mxu0 0.0
      %1237 = vmatpush1.msra.mxu0 %v1117
      %1238 = vmatprep.subr.mxu0 0.0
      %1239 = vmatpush1.msra.mxu0 %v1116
      %1240 = vmatprep.subr.mxu0 0.0
      %1241 = vmatpush1.msra.mxu0 %v1115
      %1242 = vmatprep.subr.mxu0 0.0
      %1243 = vmatpush1.msra.mxu0 %v1114
      %1244 = vmatprep.subr.mxu0 0.0
      %1245 = vmatpush2.msra.mxu0 0.0
      %1246 = vmatprep.subr.mxu0 0.0
      %1247 = vmatpush2.msra.mxu0 0.0
      %1248 = vmatprep.subr.mxu0 0.0
      %1249 = vmatpush2.msra.mxu0 0.0
      %1250 = vmatprep.subr.mxu0 0.0
      %1251 = vmatpush2.msra.mxu0 0.0
      %1252 = vmatprep.subr.mxu0 0.0
      %1253 = vmatpush2.msra.mxu0 0.0
      %1254 = vmatprep.subr.mxu0 0.0
      %1255 = vmatpush2.msra.mxu0 0.0
      %1256 = vmatprep.subr.mxu0 0.0
      %1257 = vmatpush2.msra.mxu0 0.0
      %1258 = vmatprep.subr.mxu0 0.0
      %1259 = vmatpush2.msra.mxu0 0.0
      %1260 = vmatprep.subr.mxu0 0.0
      %1261 = vmatpush2.msra.mxu0 0.0
      %1262 = vmatprep.subr.mxu0 0.0
      %1263 = vmatpush2.msra.mxu0 0.0
      %1264 = vmatprep.subr.mxu0 0.0
      %1265 = vmatpush2.msra.mxu0 0.0
      %1266 = vmatprep.subr.mxu0 0.0
      %1267 = vmatpush2.msra.mxu0 0.0
      %1268 = vmatprep.subr.mxu0 0.0
      %1269 = vmatpush2.msra.mxu0 0.0
      %1270 = vmatprep.subr.mxu0 0.0
      %1271 = vmatpush2.msra.mxu0 0.0
      %1272 = vmatprep.subr.mxu0 0.0
      %1273 = vmatpush2.msra.mxu0 0.0
      %1274 = vmatprep.subr.mxu0 0.0
      %1275 = vmatpush2.msra.mxu0 0.0
      %1276 = vmatprep.mubr.f32.mxu0 0.0
      %1277 = vmatmul.mubr.f32.gmra.mxu0 %v1210
      %v1278 = vpop.f32.mrf.mxu0
      %v1279 = vadd.f32 %v1207, %v1278
      %v1280 = vpop.f32.mrf.mxu0
      %1281 = vdwg.mxu0
      %s1282 = scalar_lea.vmem %s9, 144
      %v1283 = vld [vmem:[%s1282] sm:$0xff]
      %v1284 = vld [vmem:[%s1282 + $0x8] sm:$0xff]
      %v1285 = vld [vmem:[%s1282 + $0x10] sm:$0xff]
      %v1286 = vld [vmem:[%s1282 + $0x18] sm:$0xff]
      %v1287 = vld [vmem:[%s1282 + $0x20] sm:$0xff]
      %v1288 = vld [vmem:[%s1282 + $0x28] sm:$0xff]
      %v1289 = vld [vmem:[%s1282 + $0x30] sm:$0xff]
      %v1290 = vld [vmem:[%s1282 + $0x38] sm:$0xff]
      %v1291 = vld [vmem:[%s1282 + $0x40] sm:$0xff]
      %v1292 = vrot.slane %v1112, 2
      %v1293 = vrot.slane %v1113, 2
      %v1294 = vsel %vm992, %v1292, %v1293
      %v1295 = vsel %vm823, %v1294, 0
      %1297 = vmatprep.subr.mxu0 0.0
      %1298 = vmatpush1.msra.mxu0 0.0
      %1299 = vmatprep.subr.mxu0 0.0
      %1300 = vmatpush1.msra.mxu0 0.0
      %1301 = vmatprep.subr.mxu0 0.0
      %1302 = vmatpush1.msra.mxu0 0.0
      %1303 = vmatprep.subr.mxu0 0.0
      %1304 = vmatpush1.msra.mxu0 0.0
      %1305 = vmatprep.subr.mxu0 0.0
      %1306 = vmatpush1.msra.mxu0 0.0
      %1307 = vmatprep.subr.mxu0 0.0
      %1308 = vmatpush1.msra.mxu0 0.0
      %1309 = vmatprep.subr.mxu0 0.0
      %1310 = vmatpush1.msra.mxu0 0.0
      %1311 = vmatprep.subr.mxu0 0.0
      %1312 = vmatpush1.msra.mxu0 %v1291
      %1313 = vmatprep.subr.mxu0 0.0
      %1314 = vmatpush1.msra.mxu0 %v1290
      %1315 = vmatprep.subr.mxu0 0.0
      %1316 = vmatpush1.msra.mxu0 %v1289
      %1317 = vmatprep.subr.mxu0 0.0
      %1318 = vmatpush1.msra.mxu0 %v1288
      %1319 = vmatprep.subr.mxu0 0.0
      %1320 = vmatpush1.msra.mxu0 %v1287
      %1321 = vmatprep.subr.mxu0 0.0
      %1322 = vmatpush1.msra.mxu0 %v1286
      %1323 = vmatprep.subr.mxu0 0.0
      %1324 = vmatpush1.msra.mxu0 %v1285
      %1325 = vmatprep.subr.mxu0 0.0
      %1326 = vmatpush1.msra.mxu0 %v1284
      %1327 = vmatprep.subr.mxu0 0.0
      %1328 = vmatpush1.msra.mxu0 %v1283
      %1329 = vmatprep.subr.mxu0 0.0
      %1330 = vmatpush2.msra.mxu0 0.0
      %1331 = vmatprep.subr.mxu0 0.0
      %1332 = vmatpush2.msra.mxu0 0.0
      %1333 = vmatprep.subr.mxu0 0.0
      %1334 = vmatpush2.msra.mxu0 0.0
      %1335 = vmatprep.subr.mxu0 0.0
      %1336 = vmatpush2.msra.mxu0 0.0
      %1337 = vmatprep.subr.mxu0 0.0
      %1338 = vmatpush2.msra.mxu0 0.0
      %1339 = vmatprep.subr.mxu0 0.0
      %1340 = vmatpush2.msra.mxu0 0.0
      %1341 = vmatprep.subr.mxu0 0.0
      %1342 = vmatpush2.msra.mxu0 0.0
      %1343 = vmatprep.subr.mxu0 0.0
      %1344 = vmatpush2.msra.mxu0 0.0
      %1345 = vmatprep.subr.mxu0 0.0
      %1346 = vmatpush2.msra.mxu0 0.0
      %1347 = vmatprep.subr.mxu0 0.0
      %1348 = vmatpush2.msra.mxu0 0.0
      %1349 = vmatprep.subr.mxu0 0.0
      %1350 = vmatpush2.msra.mxu0 0.0
      %1351 = vmatprep.subr.mxu0 0.0
      %1352 = vmatpush2.msra.mxu0 0.0
      %1353 = vmatprep.subr.mxu0 0.0
      %1354 = vmatpush2.msra.mxu0 0.0
      %1355 = vmatprep.subr.mxu0 0.0
      %1356 = vmatpush2.msra.mxu0 0.0
      %1357 = vmatprep.subr.mxu0 0.0
      %1358 = vmatpush2.msra.mxu0 0.0
      %1359 = vmatprep.subr.mxu0 0.0
      %1360 = vmatpush2.msra.mxu0 0.0
      %1361 = vmatprep.mubr.f32.mxu0 0.0
      %1362 = vmatmul.mubr.f32.gmra.mxu0 %v1295
      %v1363 = vpop.f32.mrf.mxu0
      %v1364 = vadd.f32 0.0, %v1363
      %v1365 = vpop.f32.mrf.mxu0
      %1366 = vdwg.mxu0
      %v1367 = vadd.f32 %v1279, %v1364
      %v1368 = vld [vmem:[%s10] sm:$0x1]
      %v1370 = vlaneseq
      %v1371 = vshrl.u32 %v1370, 7
      %v1372 = vsub.s32 0, %v1371
      %v1373 = vrot.slane %v1368, %v1372
      %v1375 = vadd.f32 %v1367, %v1373
      %v1376 = vsub.f32 0.0, %v1375
      %v1377 = vmul.f32 %v1376, 1.442695
      %v1378 = vpow.pop %v1377
      %v1379 = vadd.f32 %v1378, 1.0
      %v1380 = vrcp.pop %v1379
      %v1381 = vmul.f32 1.0, %v1380
      %v1382 = vmul.f32 %v1375, %v1381
      %v1383 = vld [vmem:[%s5] sm:$0xff]
      %v1384 = vld [vmem:[%s5 + $0x8] sm:$0xff]
      %v1385 = vld [vmem:[%s5 + $0x10] sm:$0xff]
      %v1386 = vld [vmem:[%s5 + $0x18] sm:$0xff]
      %v1387 = vld [vmem:[%s5 + $0x20] sm:$0xff]
      %v1388 = vld [vmem:[%s5 + $0x28] sm:$0xff]
      %v1389 = vld [vmem:[%s5 + $0x30] sm:$0xff]
      %v1390 = vld [vmem:[%s5 + $0x38] sm:$0xff]
      %v1391 = vld [vmem:[%s6] sm:$0x1]
      %v1393 = vlaneseq
      %v1394 = vshrl.u32 %v1393, 7
      %v1395 = vsub.s32 0, %v1394
      %v1396 = vrot.slane %v1391, %v1395
      %v1399 = vsel %vm661, %v657, 0
      %1401 = vmatprep.subr.mxu0 0.0
      %1402 = vmatpush1.msra.mxu0 0.0
      %1403 = vmatprep.subr.mxu0 0.0
      %1404 = vmatpush1.msra.mxu0 0.0
      %1405 = vmatprep.subr.mxu0 0.0
      %1406 = vmatpush1.msra.mxu0 0.0
      %1407 = vmatprep.subr.mxu0 0.0
      %1408 = vmatpush1.msra.mxu0 0.0
      %1409 = vmatprep.subr.mxu0 0.0
      %1410 = vmatpush1.msra.mxu0 0.0
      %1411 = vmatprep.subr.mxu0 0.0
      %1412 = vmatpush1.msra.mxu0 0.0
      %1413 = vmatprep.subr.mxu0 0.0
      %1414 = vmatpush1.msra.mxu0 0.0
      %1415 = vmatprep.subr.mxu0 0.0
      %1416 = vmatpush1.msra.mxu0 0.0
      %1417 = vmatprep.subr.mxu0 0.0
      %1418 = vmatpush1.msra.mxu0 %v1390
      %1419 = vmatprep.subr.mxu0 0.0
      %1420 = vmatpush1.msra.mxu0 %v1389
      %1421 = vmatprep.subr.mxu0 0.0
      %1422 = vmatpush1.msra.mxu0 %v1388
      %1423 = vmatprep.subr.mxu0 0.0
      %1424 = vmatpush1.msra.mxu0 %v1387
      %1425 = vmatprep.subr.mxu0 0.0
      %1426 = vmatpush1.msra.mxu0 %v1386
      %1427 = vmatprep.subr.mxu0 0.0
      %1428 = vmatpush1.msra.mxu0 %v1385
      %1429 = vmatprep.subr.mxu0 0.0
      %1430 = vmatpush1.msra.mxu0 %v1384
      %1431 = vmatprep.subr.mxu0 0.0
      %1432 = vmatpush1.msra.mxu0 %v1383
      %1433 = vmatprep.subr.mxu0 0.0
      %1434 = vmatpush2.msra.mxu0 0.0
      %1435 = vmatprep.subr.mxu0 0.0
      %1436 = vmatpush2.msra.mxu0 0.0
      %1437 = vmatprep.subr.mxu0 0.0
      %1438 = vmatpush2.msra.mxu0 0.0
      %1439 = vmatprep.subr.mxu0 0.0
      %1440 = vmatpush2.msra.mxu0 0.0
      %1441 = vmatprep.subr.mxu0 0.0
      %1442 = vmatpush2.msra.mxu0 0.0
      %1443 = vmatprep.subr.mxu0 0.0
      %1444 = vmatpush2.msra.mxu0 0.0
      %1445 = vmatprep.subr.mxu0 0.0
      %1446 = vmatpush2.msra.mxu0 0.0
      %1447 = vmatprep.subr.mxu0 0.0
      %1448 = vmatpush2.msra.mxu0 0.0
      %1449 = vmatprep.subr.mxu0 0.0
      %1450 = vmatpush2.msra.mxu0 0.0
      %1451 = vmatprep.subr.mxu0 0.0
      %1452 = vmatpush2.msra.mxu0 0.0
      %1453 = vmatprep.subr.mxu0 0.0
      %1454 = vmatpush2.msra.mxu0 0.0
      %1455 = vmatprep.subr.mxu0 0.0
      %1456 = vmatpush2.msra.mxu0 0.0
      %1457 = vmatprep.subr.mxu0 0.0
      %1458 = vmatpush2.msra.mxu0 0.0
      %1459 = vmatprep.subr.mxu0 0.0
      %1460 = vmatpush2.msra.mxu0 0.0
      %1461 = vmatprep.subr.mxu0 0.0
      %1462 = vmatpush2.msra.mxu0 0.0
      %1463 = vmatprep.subr.mxu0 0.0
      %1464 = vmatpush2.msra.mxu0 0.0
      %1465 = vmatprep.mubr.f32.mxu0 0.0
      %1466 = vmatmul.mubr.f32.gmra.mxu0 %v1399
      %v1467 = vpop.f32.mrf.mxu0
      %v1468 = vadd.f32 %v1396, %v1467
      %v1469 = vpop.f32.mrf.mxu0
      %1470 = vdwg.mxu0
      %v1471 = vsub.f32 0.0, %v1468
      %v1472 = vmul.f32 %v1471, 1.442695
      %v1473 = vpow.pop %v1472
      %v1474 = vadd.f32 %v1473, 1.0
      %v1475 = vrcp.pop %v1474
      %v1476 = vmul.f32 1.0, %v1475
      %v1477 = vmul.f32 %v1468, %v1476
      %v1478 = vld [vmem:[%s11] sm:$0xff]
      %v1479 = vld [vmem:[%s11 + $0x8] sm:$0xff]
      %v1480 = vld [vmem:[%s11 + $0x10] sm:$0xff]
      %v1481 = vld [vmem:[%s11 + $0x18] sm:$0xff]
      %v1482 = vld [vmem:[%s11 + $0x20] sm:$0xff]
      %v1483 = vld [vmem:[%s11 + $0x28] sm:$0xff]
      %v1484 = vld [vmem:[%s11 + $0x30] sm:$0xff]
      %v1485 = vld [vmem:[%s11 + $0x38] sm:$0xff]
      %v1486 = vld [vmem:[%s12] sm:$0xff]
      %v1487 = vld [vmem:[%s12 + $0x8] sm:$0xff]
      %v1488 = vld [vmem:[%s12 + $0x10] sm:$0xff]
      %v1489 = vld [vmem:[%s12 + $0x18] sm:$0xff]
      %v1490 = vld [vmem:[%s12 + $0x20] sm:$0xff]
      %v1491 = vld [vmem:[%s12 + $0x28] sm:$0xff]
      %v1492 = vld [vmem:[%s12 + $0x30] sm:$0xff]
      %v1493 = vld [vmem:[%s12 + $0x38] sm:$0xff]
      %v1494 = vld [vmem:[%s12 + $0x40] sm:$0xff]
      %1495 = vmatprep.subr.mxu0 0.0
      %1496 = vmatpush1.msra.mxu0 0.0
      %1497 = vmatprep.subr.mxu0 0.0
      %1498 = vmatpush1.msra.mxu0 0.0
      %1499 = vmatprep.subr.mxu0 0.0
      %1500 = vmatpush1.msra.mxu0 0.0
      %1501 = vmatprep.subr.mxu0 0.0
      %1502 = vmatpush1.msra.mxu0 0.0
      %1503 = vmatprep.subr.mxu0 0.0
      %1504 = vmatpush1.msra.mxu0 0.0
      %1505 = vmatprep.subr.mxu0 0.0
      %1506 = vmatpush1.msra.mxu0 0.0
      %1507 = vmatprep.subr.mxu0 0.0
      %1508 = vmatpush1.msra.mxu0 0.0
      %1509 = vmatprep.subr.mxu0 0.0
      %1510 = vmatpush1.msra.mxu0 %v1494
      %1511 = vmatprep.subr.mxu0 0.0
      %1512 = vmatpush1.msra.mxu0 %v1493
      %1513 = vmatprep.subr.mxu0 0.0
      %1514 = vmatpush1.msra.mxu0 %v1492
      %1515 = vmatprep.subr.mxu0 0.0
      %1516 = vmatpush1.msra.mxu0 %v1491
      %1517 = vmatprep.subr.mxu0 0.0
      %1518 = vmatpush1.msra.mxu0 %v1490
      %1519 = vmatprep.subr.mxu0 0.0
      %1520 = vmatpush1.msra.mxu0 %v1489
      %1521 = vmatprep.subr.mxu0 0.0
      %1522 = vmatpush1.msra.mxu0 %v1488
      %1523 = vmatprep.subr.mxu0 0.0
      %1524 = vmatpush1.msra.mxu0 %v1487
      %1525 = vmatprep.subr.mxu0 0.0
      %1526 = vmatpush1.msra.mxu0 %v1486
      %1527 = vmatprep.subr.mxu0 0.0
      %1528 = vmatpush2.msra.mxu0 0.0
      %1529 = vmatprep.subr.mxu0 0.0
      %1530 = vmatpush2.msra.mxu0 0.0
      %1531 = vmatprep.subr.mxu0 0.0
      %1532 = vmatpush2.msra.mxu0 0.0
      %1533 = vmatprep.subr.mxu0 0.0
      %1534 = vmatpush2.msra.mxu0 0.0
      %1535 = vmatprep.subr.mxu0 0.0
      %1536 = vmatpush2.msra.mxu0 0.0
      %1537 = vmatprep.subr.mxu0 0.0
      %1538 = vmatpush2.msra.mxu0 0.0
      %1539 = vmatprep.subr.mxu0 0.0
      %1540 = vmatpush2.msra.mxu0 0.0
      %1541 = vmatprep.subr.mxu0 0.0
      %1542 = vmatpush2.msra.mxu0 0.0
      %1543 = vmatprep.subr.mxu0 0.0
      %1544 = vmatpush2.msra.mxu0 0.0
      %1545 = vmatprep.subr.mxu0 0.0
      %1546 = vmatpush2.msra.mxu0 0.0
      %1547 = vmatprep.subr.mxu0 0.0
      %1548 = vmatpush2.msra.mxu0 0.0
      %1549 = vmatprep.subr.mxu0 0.0
      %1550 = vmatpush2.msra.mxu0 0.0
      %1551 = vmatprep.subr.mxu0 0.0
      %1552 = vmatpush2.msra.mxu0 0.0
      %1553 = vmatprep.subr.mxu0 0.0
      %1554 = vmatpush2.msra.mxu0 0.0
      %1555 = vmatprep.subr.mxu0 0.0
      %1556 = vmatpush2.msra.mxu0 0.0
      %1557 = vmatprep.subr.mxu0 0.0
      %1558 = vmatpush2.msra.mxu0 0.0
      %1559 = vmatprep.mubr.f32.mxu0 0.0
      %1560 = vmatmul.mubr.f32.gmra.mxu0 %v1138
      %v1561 = vpop.f32.mrf.mxu0
      %v1562 = vadd.f32 0.0, %v1561
      %v1563 = vpop.f32.mrf.mxu0
      %1564 = vdwg.mxu0
      %v1566 = vsel %vm661, %v1382, 0
      %1568 = vmatprep.subr.mxu0 0.0
      %1569 = vmatpush1.msra.mxu0 0.0
      %1570 = vmatprep.subr.mxu0 0.0
      %1571 = vmatpush1.msra.mxu0 0.0
      %1572 = vmatprep.subr.mxu0 0.0
      %1573 = vmatpush1.msra.mxu0 0.0
      %1574 = vmatprep.subr.mxu0 0.0
      %1575 = vmatpush1.msra.mxu0 0.0
      %1576 = vmatprep.subr.mxu0 0.0
      %1577 = vmatpush1.msra.mxu0 0.0
      %1578 = vmatprep.subr.mxu0 0.0
      %1579 = vmatpush1.msra.mxu0 0.0
      %1580 = vmatprep.subr.mxu0 0.0
      %1581 = vmatpush1.msra.mxu0 0.0
      %1582 = vmatprep.subr.mxu0 0.0
      %1583 = vmatpush1.msra.mxu0 0.0
      %1584 = vmatprep.subr.mxu0 0.0
      %1585 = vmatpush1.msra.mxu0 %v1485
      %1586 = vmatprep.subr.mxu0 0.0
      %1587 = vmatpush1.msra.mxu0 %v1484
      %1588 = vmatprep.subr.mxu0 0.0
      %1589 = vmatpush1.msra.mxu0 %v1483
      %1590 = vmatprep.subr.mxu0 0.0
      %1591 = vmatpush1.msra.mxu0 %v1482
      %1592 = vmatprep.subr.mxu0 0.0
      %1593 = vmatpush1.msra.mxu0 %v1481
      %1594 = vmatprep.subr.mxu0 0.0
      %1595 = vmatpush1.msra.mxu0 %v1480
      %1596 = vmatprep.subr.mxu0 0.0
      %1597 = vmatpush1.msra.mxu0 %v1479
      %1598 = vmatprep.subr.mxu0 0.0
      %1599 = vmatpush1.msra.mxu0 %v1478
      %1600 = vmatprep.subr.mxu0 0.0
      %1601 = vmatpush2.msra.mxu0 0.0
      %1602 = vmatprep.subr.mxu0 0.0
      %1603 = vmatpush2.msra.mxu0 0.0
      %1604 = vmatprep.subr.mxu0 0.0
      %1605 = vmatpush2.msra.mxu0 0.0
      %1606 = vmatprep.subr.mxu0 0.0
      %1607 = vmatpush2.msra.mxu0 0.0
      %1608 = vmatprep.subr.mxu0 0.0
      %1609 = vmatpush2.msra.mxu0 0.0
      %1610 = vmatprep.subr.mxu0 0.0
      %1611 = vmatpush2.msra.mxu0 0.0
      %1612 = vmatprep.subr.mxu0 0.0
      %1613 = vmatpush2.msra.mxu0 0.0
      %1614 = vmatprep.subr.mxu0 0.0
      %1615 = vmatpush2.msra.mxu0 0.0
      %1616 = vmatprep.subr.mxu0 0.0
      %1617 = vmatpush2.msra.mxu0 0.0
      %1618 = vmatprep.subr.mxu0 0.0
      %1619 = vmatpush2.msra.mxu0 0.0
      %1620 = vmatprep.subr.mxu0 0.0
      %1621 = vmatpush2.msra.mxu0 0.0
      %1622 = vmatprep.subr.mxu0 0.0
      %1623 = vmatpush2.msra.mxu0 0.0
      %1624 = vmatprep.subr.mxu0 0.0
      %1625 = vmatpush2.msra.mxu0 0.0
      %1626 = vmatprep.subr.mxu0 0.0
      %1627 = vmatpush2.msra.mxu0 0.0
      %1628 = vmatprep.subr.mxu0 0.0
      %1629 = vmatpush2.msra.mxu0 0.0
      %1630 = vmatprep.subr.mxu0 0.0
      %1631 = vmatpush2.msra.mxu0 0.0
      %1632 = vmatprep.mubr.f32.mxu0 0.0
      %1633 = vmatmul.mubr.f32.gmra.mxu0 %v1566
      %v1634 = vpop.f32.mrf.mxu0
      %v1635 = vadd.f32 %v1562, %v1634
      %v1636 = vpop.f32.mrf.mxu0
      %1637 = vdwg.mxu0
      %v1638 = vld [vmem:[%s13] sm:$0xff]
      %v1639 = vld [vmem:[%s13 + $0x8] sm:$0xff]
      %v1640 = vld [vmem:[%s13 + $0x10] sm:$0xff]
      %v1641 = vld [vmem:[%s13 + $0x18] sm:$0xff]
      %v1642 = vld [vmem:[%s13 + $0x20] sm:$0xff]
      %v1643 = vld [vmem:[%s13 + $0x28] sm:$0xff]
      %v1644 = vld [vmem:[%s13 + $0x30] sm:$0xff]
      %v1645 = vld [vmem:[%s13 + $0x38] sm:$0xff]
      %v1646 = vld [vmem:[%s13 + $0x40] sm:$0xff]
      %1647 = vmatprep.subr.mxu0 0.0
      %1648 = vmatpush1.msra.mxu0 0.0
      %1649 = vmatprep.subr.mxu0 0.0
      %1650 = vmatpush1.msra.mxu0 0.0
      %1651 = vmatprep.subr.mxu0 0.0
      %1652 = vmatpush1.msra.mxu0 0.0
      %1653 = vmatprep.subr.mxu0 0.0
      %1654 = vmatpush1.msra.mxu0 0.0
      %1655 = vmatprep.subr.mxu0 0.0
      %1656 = vmatpush1.msra.mxu0 0.0
      %1657 = vmatprep.subr.mxu0 0.0
      %1658 = vmatpush1.msra.mxu0 0.0
      %1659 = vmatprep.subr.mxu0 0.0
      %1660 = vmatpush1.msra.mxu0 0.0
      %1661 = vmatprep.subr.mxu0 0.0
      %1662 = vmatpush1.msra.mxu0 %v1646
      %1663 = vmatprep.subr.mxu0 0.0
      %1664 = vmatpush1.msra.mxu0 %v1645
      %1665 = vmatprep.subr.mxu0 0.0
      %1666 = vmatpush1.msra.mxu0 %v1644
      %1667 = vmatprep.subr.mxu0 0.0
      %1668 = vmatpush1.msra.mxu0 %v1643
      %1669 = vmatprep.subr.mxu0 0.0
      %1670 = vmatpush1.msra.mxu0 %v1642
      %1671 = vmatprep.subr.mxu0 0.0
      %1672 = vmatpush1.msra.mxu0 %v1641
      %1673 = vmatprep.subr.mxu0 0.0
      %1674 = vmatpush1.msra.mxu0 %v1640
      %1675 = vmatprep.subr.mxu0 0.0
      %1676 = vmatpush1.msra.mxu0 %v1639
      %1677 = vmatprep.subr.mxu0 0.0
      %1678 = vmatpush1.msra.mxu0 %v1638
      %1679 = vmatprep.subr.mxu0 0.0
      %1680 = vmatpush2.msra.mxu0 0.0
      %1681 = vmatprep.subr.mxu0 0.0
      %1682 = vmatpush2.msra.mxu0 0.0
      %1683 = vmatprep.subr.mxu0 0.0
      %1684 = vmatpush2.msra.mxu0 0.0
      %1685 = vmatprep.subr.mxu0 0.0
      %1686 = vmatpush2.msra.mxu0 0.0
      %1687 = vmatprep.subr.mxu0 0.0
      %1688 = vmatpush2.msra.mxu0 0.0
      %1689 = vmatprep.subr.mxu0 0.0
      %1690 = vmatpush2.msra.mxu0 0.0
      %1691 = vmatprep.subr.mxu0 0.0
      %1692 = vmatpush2.msra.mxu0 0.0
      %1693 = vmatprep.subr.mxu0 0.0
      %1694 = vmatpush2.msra.mxu0 0.0
      %1695 = vmatprep.subr.mxu0 0.0
      %1696 = vmatpush2.msra.mxu0 0.0
      %1697 = vmatprep.subr.mxu0 0.0
      %1698 = vmatpush2.msra.mxu0 0.0
      %1699 = vmatprep.subr.mxu0 0.0
      %1700 = vmatpush2.msra.mxu0 0.0
      %1701 = vmatprep.subr.mxu0 0.0
      %1702 = vmatpush2.msra.mxu0 0.0
      %1703 = vmatprep.subr.mxu0 0.0
      %1704 = vmatpush2.msra.mxu0 0.0
      %1705 = vmatprep.subr.mxu0 0.0
      %1706 = vmatpush2.msra.mxu0 0.0
      %1707 = vmatprep.subr.mxu0 0.0
      %1708 = vmatpush2.msra.mxu0 0.0
      %1709 = vmatprep.subr.mxu0 0.0
      %1710 = vmatpush2.msra.mxu0 0.0
      %1711 = vmatprep.mubr.f32.mxu0 0.0
      %1712 = vmatmul.mubr.f32.gmra.mxu0 %v996
      %v1713 = vpop.f32.mrf.mxu0
      %v1714 = vadd.f32 0.0, %v1713
      %v1715 = vpop.f32.mrf.mxu0
      %1716 = vdwg.mxu0
      %v1717 = vadd.f32 %v1635, %v1714
      %v1718 = vld [vmem:[%s14] sm:$0xff]
      %v1719 = vld [vmem:[%s14 + $0x8] sm:$0xff]
      %v1720 = vld [vmem:[%s14 + $0x10] sm:$0xff]
      %v1721 = vld [vmem:[%s14 + $0x18] sm:$0xff]
      %v1722 = vld [vmem:[%s14 + $0x20] sm:$0xff]
      %v1723 = vld [vmem:[%s14 + $0x28] sm:$0xff]
      %v1724 = vld [vmem:[%s14 + $0x30] sm:$0xff]
      %v1725 = vld [vmem:[%s14 + $0x38] sm:$0xff]
      %v1727 = vsel %vm661, %v1477, 0
      %1729 = vmatprep.subr.mxu0 0.0
      %1730 = vmatpush1.msra.mxu0 0.0
      %1731 = vmatprep.subr.mxu0 0.0
      %1732 = vmatpush1.msra.mxu0 0.0
      %1733 = vmatprep.subr.mxu0 0.0
      %1734 = vmatpush1.msra.mxu0 0.0
      %1735 = vmatprep.subr.mxu0 0.0
      %1736 = vmatpush1.msra.mxu0 0.0
      %1737 = vmatprep.subr.mxu0 0.0
      %1738 = vmatpush1.msra.mxu0 0.0
      %1739 = vmatprep.subr.mxu0 0.0
      %1740 = vmatpush1.msra.mxu0 0.0
      %1741 = vmatprep.subr.mxu0 0.0
      %1742 = vmatpush1.msra.mxu0 0.0
      %1743 = vmatprep.subr.mxu0 0.0
      %1744 = vmatpush1.msra.mxu0 0.0
      %1745 = vmatprep.subr.mxu0 0.0
      %1746 = vmatpush1.msra.mxu0 %v1725
      %1747 = vmatprep.subr.mxu0 0.0
      %1748 = vmatpush1.msra.mxu0 %v1724
      %1749 = vmatprep.subr.mxu0 0.0
      %1750 = vmatpush1.msra.mxu0 %v1723
      %1751 = vmatprep.subr.mxu0 0.0
      %1752 = vmatpush1.msra.mxu0 %v1722
      %1753 = vmatprep.subr.mxu0 0.0
      %1754 = vmatpush1.msra.mxu0 %v1721
      %1755 = vmatprep.subr.mxu0 0.0
      %1756 = vmatpush1.msra.mxu0 %v1720
      %1757 = vmatprep.subr.mxu0 0.0
      %1758 = vmatpush1.msra.mxu0 %v1719
      %1759 = vmatprep.subr.mxu0 0.0
      %1760 = vmatpush1.msra.mxu0 %v1718
      %1761 = vmatprep.subr.mxu0 0.0
      %1762 = vmatpush2.msra.mxu0 0.0
      %1763 = vmatprep.subr.mxu0 0.0
      %1764 = vmatpush2.msra.mxu0 0.0
      %1765 = vmatprep.subr.mxu0 0.0
      %1766 = vmatpush2.msra.mxu0 0.0
      %1767 = vmatprep.subr.mxu0 0.0
      %1768 = vmatpush2.msra.mxu0 0.0
      %1769 = vmatprep.subr.mxu0 0.0
      %1770 = vmatpush2.msra.mxu0 0.0
      %1771 = vmatprep.subr.mxu0 0.0
      %1772 = vmatpush2.msra.mxu0 0.0
      %1773 = vmatprep.subr.mxu0 0.0
      %1774 = vmatpush2.msra.mxu0 0.0
      %1775 = vmatprep.subr.mxu0 0.0
      %1776 = vmatpush2.msra.mxu0 0.0
      %1777 = vmatprep.subr.mxu0 0.0
      %1778 = vmatpush2.msra.mxu0 0.0
      %1779 = vmatprep.subr.mxu0 0.0
      %1780 = vmatpush2.msra.mxu0 0.0
      %1781 = vmatprep.subr.mxu0 0.0
      %1782 = vmatpush2.msra.mxu0 0.0
      %1783 = vmatprep.subr.mxu0 0.0
      %1784 = vmatpush2.msra.mxu0 0.0
      %1785 = vmatprep.subr.mxu0 0.0
      %1786 = vmatpush2.msra.mxu0 0.0
      %1787 = vmatprep.subr.mxu0 0.0
      %1788 = vmatpush2.msra.mxu0 0.0
      %1789 = vmatprep.subr.mxu0 0.0
      %1790 = vmatpush2.msra.mxu0 0.0
      %1791 = vmatprep.subr.mxu0 0.0
      %1792 = vmatpush2.msra.mxu0 0.0
      %1793 = vmatprep.mubr.f32.mxu0 0.0
      %1794 = vmatmul.mubr.f32.gmra.mxu0 %v1727
      %v1795 = vpop.f32.mrf.mxu0
      %v1796 = vadd.f32 0.0, %v1795
      %v1797 = vpop.f32.mrf.mxu0
      %1798 = vdwg.mxu0
      %v1799 = vadd.f32 %v1717, %v1796
      %v1800 = vld [vmem:[%s15] sm:$0x1]
      %v1802 = vlaneseq
      %v1803 = vshrl.u32 %v1802, 7
      %v1804 = vsub.s32 0, %v1803
      %v1805 = vrot.slane %v1800, %v1804
      %v1807 = vadd.f32 %v1799, %v1805
      %v1808 = vsub.f32 0.0, %v1807
      %v1809 = vmul.f32 %v1808, 1.442695
      %v1810 = vpow.pop %v1809
      %v1811 = vadd.f32 %v1810, 1.0
      %v1812 = vrcp.pop %v1811
      %v1813 = vmul.f32 1.0, %v1812
      %v1814 = vmul.f32 %v1807, %v1813
      %1815 = vst [vmem:[%s656] sm:$0xff] %v1814
      %p1816 = scmp.lt.s32.totalorder %s31, 1
      %s1817 = scalar_select %p1816, %s31, 1
      %p1818 = scmp.lt.s32.totalorder %s32, 1
      %s1819 = scalar_select %p1818, %s32, 1
      %s1820 = smul.addr %s1817, 2
      %s1821 = sadd.s32 %s1819, %s1820
      %s1822 = smul.addr %s1821, 8
      %s1823 = scalar_lea.vmem %s16, %s1822
      // Predicated region
      $region85: #{elan_forward.1} parent=83 // pred_check
        %p1824 = pneg %p428
      $region86: #{elan_forward.1} parent=83 // pred_check_branch
        %1826 = sbr.rel (%p1824) target = $region88
      $region87: #{elan_forward.1} parent=83 // pred_region
        _
      $region88: #{elan_forward.1} parent=83 // pred_fallthru
        _
    $region84: #{elan_forward.1} parent=5 // pred_fallthru
      _
    %p1827 = scmp.le.s32.totalorder 2, %s22
    // Predicated region
    $region89: #{elan_forward.1} parent=5 // pred_check
      %p1828 = pneg %p1827
    $region90: #{elan_forward.1} parent=5 // pred_check_branch
      %1830 = sbr.rel (%p1828) target = $region92
    $region91: #{elan_forward.1} parent=5 // pred_region
      %s1831 = ssub.s32 %s22, 2
      // Predicated region
      $region93: #{elan_forward.1} parent=91 // pred_check
        %p1832 = pneg %p434
      $region94: #{elan_forward.1} parent=91 // pred_check_branch
        %1834 = sbr.rel (%p1832) target = $region96
      $region95: #{elan_forward.1} parent=91 // pred_region
        %p1835 = scmp.lt.s32.totalorder %s33, 1
        %s1836 = scalar_select %p1835, %s33, 1
        %p1837 = scmp.lt.s32.totalorder %s34, 1
        %s1838 = scalar_select %p1837, %s34, 1
        %s1839 = smul.addr %s1836, 2
        %s1840 = sadd.s32 %s1838, %s1839
        %s1841 = smul.addr %s1840, 8
        %s1842 = scalar_lea.vmem %s16, %s1841
      $region96: #{elan_forward.1} parent=91 // pred_fallthru
        _
    $region92: #{elan_forward.1} parent=5 // pred_fallthru
      _
  $region6: #{elan_forward.1} parent=0 // loop_footer
    %s26 = sadd.s32 1, %s22
  $region7: #{elan_forward.1} parent=0 // loop_footer_branch
    %21 = sbr.rel target = $region3
  $region8: #{elan_forward.1} parent=0 // loop_exit
    _

</llo_original>
